<compile_context>
chip_gen: v7x
topology: tpu7x:2x2x1
jax: 0.10.0
libtpu: 0.0.40
codegen_flags: <defaults>
</compile_context>

<pallas_src>
import functools

import jax
import jax.numpy as jnp
from jax.experimental import pallas as pl
from jax.experimental.pallas import tpu as pltpu


def _conv_stack_kernel(*refs, num_layers, L, K, left, right, dims, compute_dtype):
    """Fused Conv1d('same') stack for one batch element.

    refs = (x_ref, w_0, b_0, ..., w_{n-1}, b_{n-1}, o_ref, buf_a, buf_b)
      x_ref : (1, L, C_in)          input block (channels-last)
      w_i   : (K, Cin_i, Cout_i)    weights, compute_dtype
      b_i   : (1, Cout_i)           bias, f32
      o_ref : (1, L, C_out)         output block
      buf_a/buf_b : (L + K - 1, Cmax) VMEM ping-pong activation buffers
    """
    x_ref = refs[0]
    layer_refs = refs[1:1 + 2 * num_layers]
    o_ref = refs[1 + 2 * num_layers]
    buf_a, buf_b = refs[2 + 2 * num_layers:]
    bufs = (buf_a, buf_b)
    Lp = L + K - 1

    # In-kernel 'same' padding: zero only the K-1 halo rows (the interior rows
    # are fully overwritten for every layer below).
    for buf in bufs:
        if left > 0:
            buf[0:left, :] = jnp.zeros((left, buf.shape[1]), buf.dtype)
        if right > 0:
            buf[left + L:Lp, :] = jnp.zeros((right, buf.shape[1]), buf.dtype)

    # Stage the input into the interior of the padded scratch (bf16 feed to MXU).
    c0 = dims[0][0]
    buf_a[left:left + L, :c0] = x_ref[0].astype(compute_dtype)

    cur = 0
    for i in range(num_layers):
        cin, cout = dims[i]
        w_ref = layer_refs[2 * i]
        b_ref = layer_refs[2 * i + 1]
        src = bufs[cur]

        # K is small & static -> unrolled loop of flat 2-D MXU matmuls,
        # f32 accumulation in vregs.
        acc = jnp.zeros((L, cout), jnp.float32)
        for k in range(K):
            acc = acc + jnp.dot(src[k:k + L, :cin], w_ref[k],
                                preferred_element_type=jnp.float32)
        acc = acc + b_ref[...].astype(jnp.float32)      # bias, hoisted out of tap loop

        if i < num_layers - 1:
            acc = jnp.maximum(acc, 0.0)                 # fused ReLU (f32 epilogue)
            dst = bufs[1 - cur]
            dst[left:left + L, :cout] = acc.astype(compute_dtype)
            cur = 1 - cur
        else:
            o_ref[0] = acc.astype(o_ref.dtype)


def conv_stack(x, params, *, kernel_size, compute_dtype=jnp.bfloat16):
    """x: (B, L, C_in); params: list of (w(K,Cin,Cout), b(Cout,)) -> (B, L, C_out)."""
    B, L, c_in = x.shape
    num_layers = len(params)
    K = kernel_size
    # PyTorch padding='same' (stride 1): total = K-1, left = total//2, rest right.
    total = K - 1
    left = total // 2
    right = total - left

    dims = []
    for (w, _) in params:
        assert w.shape[0] == K
        dims.append((int(w.shape[1]), int(w.shape[2])))
    c_out = dims[-1][1]
    c_max = max([c_in] + [d[1] for d in dims])

    kernel = functools.partial(
        _conv_stack_kernel, num_layers=num_layers, L=L, K=K,
        left=left, right=right, dims=tuple(dims), compute_dtype=compute_dtype)

    in_specs = [pl.BlockSpec((1, L, c_in), lambda b: (b, 0, 0))]
    args = [x]
    flops = 0
    weight_bytes = 0
    for (w, bias) in params:
        _, ci, co = w.shape
        in_specs.append(pl.BlockSpec((K, ci, co), lambda b: (0, 0, 0)))
        in_specs.append(pl.BlockSpec((1, co), lambda b: (0, 0)))
        args.append(w.astype(compute_dtype))            # bf16 weights -> half the DMA bytes
        args.append(bias.reshape(1, co).astype(jnp.float32))
        flops += 2 * B * L * K * ci * co
        weight_bytes += w.size * jnp.dtype(compute_dtype).itemsize + bias.size * 4

    bytes_accessed = (x.size * x.dtype.itemsize
                      + B * L * c_out * x.dtype.itemsize
                      + weight_bytes)

    return pl.pallas_call(
        kernel,
        grid=(B,),
        in_specs=in_specs,
        out_specs=pl.BlockSpec((1, L, c_out), lambda b: (b, 0, 0)),
        out_shape=jax.ShapeDtypeStruct((B, L, c_out), x.dtype),
        scratch_shapes=[pltpu.VMEM((L + K - 1, c_max), compute_dtype)] * 2,
        compiler_params=pltpu.CompilerParams(dimension_semantics=("parallel",)),
        cost_estimate=pl.CostEstimate(flops=flops, transcendentals=0,
                                      bytes_accessed=bytes_accessed),
    )(*args)


class Conv:
    """JAX/Pallas port of the PyTorch Conv module (Conv1d stack, 'same' padding)."""

    def __init__(self, input_dim, hidden_dim, output_dim, num_layers, kernel_size, key,
                 compute_dtype=jnp.bfloat16):
        self.num_layers = num_layers
        self.kernel_size = kernel_size
        self.compute_dtype = compute_dtype
        h = [hidden_dim] * (num_layers - 1)
        self.params = []
        for n, k_out in zip([input_dim] + h, h + [output_dim]):
            key, wk, bk = jax.random.split(key, 3)
            # Deterministic init mimicking torch Conv1d default (uniform +-1/sqrt(fan_in)).
            fan_in = n * kernel_size
            bound = 1.0 / (fan_in ** 0.5)
            w = jax.random.uniform(wk, (kernel_size, n, k_out), jnp.float32, -bound, bound)
            b = jax.random.uniform(bk, (k_out,), jnp.float32, -bound, bound)
            self.params.append((w, b))

    def __call__(self, x):
        # x: (B, L, input_dim) — same tensor the PyTorch forward receives.
        return conv_stack(x, self.params, kernel_size=self.kernel_size,
                          compute_dtype=self.compute_dtype)


def _reference_forward(params, x, num_layers, kernel_size, compute_dtype=jnp.bfloat16):
    """Pure-JAX reference (no Pallas) mirroring the kernel's precision choices."""
    K = kernel_size
    total = K - 1
    left = total // 2
    right = total - left
    act = x
    for i, (w, b) in enumerate(params):
        _, cin, cout = w.shape
        B, L, _ = act.shape
        xp = jnp.pad(act.astype(compute_dtype), ((0, 0), (left, right), (0, 0)))
        wc = w.astype(compute_dtype)
        out = jnp.zeros((B, L, cout), jnp.float32)
        for k in range(K):
            out = out + jnp.einsum('blc,cd->bld', xp[:, k:k + L, :], wc[k],
                                   preferred_element_type=jnp.float32)
        out = out + b[None, None, :].astype(jnp.float32)
        if i < num_layers - 1:
            act = jnp.maximum(out, 0.0).astype(compute_dtype)
        else:
            act = out.astype(x.dtype)
    return act


if __name__ == "__main__":
    key = jax.random.PRNGKey(0)
    key, xk, pk = jax.random.split(key, 3)

    B, L = 2, 128
    input_dim, hidden_dim, output_dim = 32, 32, 16
    num_layers, kernel_size = 3, 3

    x = jax.random.normal(xk, (B, L, input_dim), jnp.float32)

    model = Conv(input_dim, hidden_dim, output_dim, num_layers, kernel_size, pk)

    out = jax.block_until_ready(model(x))

    ref_bf16 = jax.block_until_ready(
        _reference_forward(model.params, x, num_layers, kernel_size,
                           compute_dtype=jnp.bfloat16))
    ref_f32 = jax.block_until_ready(
        _reference_forward(model.params, x, num_layers, kernel_size,
                           compute_dtype=jnp.float32))

    assert out.shape == (B, L, output_dim), out.shape
    # Tight check vs a reference using identical bf16-in / f32-accumulate math.
    assert jnp.allclose(out, ref_bf16, atol=1e-2, rtol=1e-2), \
        float(jnp.max(jnp.abs(out - ref_bf16)))
    # Loose sanity check vs the pure-f32 reference (bf16 quantization headroom).
    assert jnp.allclose(out, ref_f32, atol=5e-2, rtol=5e-2), \
        float(jnp.max(jnp.abs(out - ref_f32)))

    print("KERNEL_OK")
</pallas_src>

<mosaic_0001>
module attributes {stable_mosaic.version = 11 : i64} {
  func.func @_conv_stack_kernel(%arg0: i32, %arg1: memref<1x128x32xf32, #tpu.memory_space<vmem>>, %arg2: memref<3x32x32xbf16, #tpu.memory_space<vmem>>, %arg3: memref<1x32xf32, #tpu.memory_space<vmem>>, %arg4: memref<3x32x32xbf16, #tpu.memory_space<vmem>>, %arg5: memref<1x32xf32, #tpu.memory_space<vmem>>, %arg6: memref<3x32x16xbf16, #tpu.memory_space<vmem>>, %arg7: memref<1x16xf32, #tpu.memory_space<vmem>>, %arg8: memref<1x128x16xf32, #tpu.memory_space<vmem>>, %arg9: memref<130x32xbf16, #tpu.memory_space<vmem>>, %arg10: memref<130x32xbf16, #tpu.memory_space<vmem>>) attributes {dimension_semantics = [#tpu.dimension_semantics<parallel>], iteration_bounds = array<i64: 2>, scalar_prefetch = 0 : i64, scratch_operands = 2 : i64, tpu.core_type = #tpu.core_type<tc>, window_params = [{transform_indices = @transform_0, window_bounds = array<i64: 1, 128, 32>}, {pipeline_mode = #tpu.pipeline_mode<synchronous>, transform_indices = @transform_1, window_bounds = array<i64: 3, 32, 32>}, {pipeline_mode = #tpu.pipeline_mode<synchronous>, transform_indices = @transform_2, window_bounds = array<i64: 1, 32>}, {pipeline_mode = #tpu.pipeline_mode<synchronous>, transform_indices = @transform_3, window_bounds = array<i64: 3, 32, 32>}, {pipeline_mode = #tpu.pipeline_mode<synchronous>, transform_indices = @transform_4, window_bounds = array<i64: 1, 32>}, {pipeline_mode = #tpu.pipeline_mode<synchronous>, transform_indices = @transform_5, window_bounds = array<i64: 3, 32, 16>}, {pipeline_mode = #tpu.pipeline_mode<synchronous>, transform_indices = @transform_6, window_bounds = array<i64: 1, 16>}, {transform_indices = @transform_7, window_bounds = array<i64: 1, 128, 16>}]} {
    %cst = arith.constant 0.000000e+00 : bf16
    %0 = vector.broadcast %cst : bf16 to vector<1x32xbf16>
    %c0 = arith.constant 0 : index
    %c0_0 = arith.constant 0 : index
    %1 = vector.load %arg9[%c0, %c0_0] : memref<130x32xbf16, #tpu.memory_space<vmem>>, vector<1x32xbf16>
    tpu.vector_store %arg9[%c0, %c0_0], %0 {strides = array<i32>} : memref<130x32xbf16, #tpu.memory_space<vmem>>, vector<1x32xbf16>,
    %cst_1 = arith.constant 0.000000e+00 : bf16
    %2 = vector.broadcast %cst_1 : bf16 to vector<1x32xbf16>
    %c129 = arith.constant 129 : index
    %c0_2 = arith.constant 0 : index
    %3 = vector.load %arg9[%c129, %c0_2] : memref<130x32xbf16, #tpu.memory_space<vmem>>, vector<1x32xbf16>
    tpu.vector_store %arg9[%c129, %c0_2], %2 {strides = array<i32>} : memref<130x32xbf16, #tpu.memory_space<vmem>>, vector<1x32xbf16>,
    %cst_3 = arith.constant 0.000000e+00 : bf16
    %4 = vector.broadcast %cst_3 : bf16 to vector<1x32xbf16>
    %c0_4 = arith.constant 0 : index
    %c0_5 = arith.constant 0 : index
    %5 = vector.load %arg10[%c0_4, %c0_5] : memref<130x32xbf16, #tpu.memory_space<vmem>>, vector<1x32xbf16>
    tpu.vector_store %arg10[%c0_4, %c0_5], %4 {strides = array<i32>} : memref<130x32xbf16, #tpu.memory_space<vmem>>, vector<1x32xbf16>,
    %cst_6 = arith.constant 0.000000e+00 : bf16
    %6 = vector.broadcast %cst_6 : bf16 to vector<1x32xbf16>
    %c129_7 = arith.constant 129 : index
    %c0_8 = arith.constant 0 : index
    %7 = vector.load %arg10[%c129_7, %c0_8] : memref<130x32xbf16, #tpu.memory_space<vmem>>, vector<1x32xbf16>
    tpu.vector_store %arg10[%c129_7, %c0_8], %6 {strides = array<i32>} : memref<130x32xbf16, #tpu.memory_space<vmem>>, vector<1x32xbf16>,
    %c0_9 = arith.constant 0 : index
    %c0_10 = arith.constant 0 : index
    %c0_11 = arith.constant 0 : index
    %8 = vector.load %arg1[%c0_9, %c0_10, %c0_11] : memref<1x128x32xf32, #tpu.memory_space<vmem>>, vector<1x128x32xf32>
    %9 = vector.shape_cast %8 : vector<1x128x32xf32> to vector<128x32xf32>
    %10 = arith.truncf %9 : vector<128x32xf32> to vector<128x32xbf16>
    %c1 = arith.constant 1 : index
    %c0_12 = arith.constant 0 : index
    %11 = vector.load %arg9[%c1, %c0_12] : memref<130x32xbf16, #tpu.memory_space<vmem>>, vector<128x32xbf16>
    tpu.vector_store %arg9[%c1, %c0_12], %10 {strides = array<i32>} : memref<130x32xbf16, #tpu.memory_space<vmem>>, vector<128x32xbf16>,
    %cst_13 = arith.constant 0.000000e+00 : f32
    %12 = vector.broadcast %cst_13 : f32 to vector<128x32xf32>
    %c0_14 = arith.constant 0 : index
    %c0_15 = arith.constant 0 : index
    %13 = vector.load %arg9[%c0_14, %c0_15] : memref<130x32xbf16, #tpu.memory_space<vmem>>, vector<128x32xbf16>
    %c0_16 = arith.constant 0 : index
    %c0_17 = arith.constant 0 : index
    %c0_18 = arith.constant 0 : index
    %14 = vector.load %arg2[%c0_16, %c0_17, %c0_18] : memref<3x32x32xbf16, #tpu.memory_space<vmem>>, vector<1x32x32xbf16>
    %15 = vector.shape_cast %14 : vector<1x32x32xbf16> to vector<32x32xbf16>
    %cst_19 = arith.constant dense<0.000000e+00> : vector<128x32xf32>
    %16 = tpu.matmul %13, %15, %cst_19 {dimension_numbers = #tpu.dot_dimension_numbers<[1], [0], [0], [1], [0, 0, 1, 1], [], []>} : vector<128x32xbf16>, vector<32x32xbf16>, vector<128x32xf32> -> vector<128x32xf32>
    %17 = arith.addf %12, %16 : vector<128x32xf32>
    %c1_20 = arith.constant 1 : index
    %c0_21 = arith.constant 0 : index
    %18 = vector.load %arg9[%c1_20, %c0_21] : memref<130x32xbf16, #tpu.memory_space<vmem>>, vector<128x32xbf16>
    %c1_22 = arith.constant 1 : index
    %c0_23 = arith.constant 0 : index
    %c0_24 = arith.constant 0 : index
    %19 = vector.load %arg2[%c1_22, %c0_23, %c0_24] : memref<3x32x32xbf16, #tpu.memory_space<vmem>>, vector<1x32x32xbf16>
    %20 = vector.shape_cast %19 : vector<1x32x32xbf16> to vector<32x32xbf16>
    %cst_25 = arith.constant dense<0.000000e+00> : vector<128x32xf32>
    %21 = tpu.matmul %18, %20, %cst_25 {dimension_numbers = #tpu.dot_dimension_numbers<[1], [0], [0], [1], [0, 0, 1, 1], [], []>} : vector<128x32xbf16>, vector<32x32xbf16>, vector<128x32xf32> -> vector<128x32xf32>
    %22 = arith.addf %17, %21 : vector<128x32xf32>
    %c2 = arith.constant 2 : index
    %c0_26 = arith.constant 0 : index
    %23 = vector.load %arg9[%c2, %c0_26] : memref<130x32xbf16, #tpu.memory_space<vmem>>, vector<128x32xbf16>
    %c2_27 = arith.constant 2 : index
    %c0_28 = arith.constant 0 : index
    %c0_29 = arith.constant 0 : index
    %24 = vector.load %arg2[%c2_27, %c0_28, %c0_29] : memref<3x32x32xbf16, #tpu.memory_space<vmem>>, vector<1x32x32xbf16>
    %25 = vector.shape_cast %24 : vector<1x32x32xbf16> to vector<32x32xbf16>
    %cst_30 = arith.constant dense<0.000000e+00> : vector<128x32xf32>
    %26 = tpu.matmul %23, %25, %cst_30 {dimension_numbers = #tpu.dot_dimension_numbers<[1], [0], [0], [1], [0, 0, 1, 1], [], []>} : vector<128x32xbf16>, vector<32x32xbf16>, vector<128x32xf32> -> vector<128x32xf32>
    %27 = arith.addf %22, %26 : vector<128x32xf32>
    %c0_31 = arith.constant 0 : index
    %c0_32 = arith.constant 0 : index
    %28 = vector.load %arg3[%c0_31, %c0_32] : memref<1x32xf32, #tpu.memory_space<vmem>>, vector<1x32xf32>
    %29 = vector.broadcast %28 : vector<1x32xf32> to vector<128x32xf32>
    %30 = arith.addf %27, %29 : vector<128x32xf32>
    %cst_33 = arith.constant 0.000000e+00 : f32
    %31 = vector.broadcast %cst_33 : f32 to vector<128x32xf32>
    %32 = arith.maximumf %30, %31 : vector<128x32xf32>
    %33 = arith.truncf %32 : vector<128x32xf32> to vector<128x32xbf16>
    %c1_34 = arith.constant 1 : index
    %c0_35 = arith.constant 0 : index
    %34 = vector.load %arg10[%c1_34, %c0_35] : memref<130x32xbf16, #tpu.memory_space<vmem>>, vector<128x32xbf16>
    tpu.vector_store %arg10[%c1_34, %c0_35], %33 {strides = array<i32>} : memref<130x32xbf16, #tpu.memory_space<vmem>>, vector<128x32xbf16>,
    %cst_36 = arith.constant 0.000000e+00 : f32
    %35 = vector.broadcast %cst_36 : f32 to vector<128x32xf32>
    %c0_37 = arith.constant 0 : index
    %c0_38 = arith.constant 0 : index
    %36 = vector.load %arg10[%c0_37, %c0_38] : memref<130x32xbf16, #tpu.memory_space<vmem>>, vector<128x32xbf16>
    %c0_39 = arith.constant 0 : index
    %c0_40 = arith.constant 0 : index
    %c0_41 = arith.constant 0 : index
    %37 = vector.load %arg4[%c0_39, %c0_40, %c0_41] : memref<3x32x32xbf16, #tpu.memory_space<vmem>>, vector<1x32x32xbf16>
    %38 = vector.shape_cast %37 : vector<1x32x32xbf16> to vector<32x32xbf16>
    %cst_42 = arith.constant dense<0.000000e+00> : vector<128x32xf32>
    %39 = tpu.matmul %36, %38, %cst_42 {dimension_numbers = #tpu.dot_dimension_numbers<[1], [0], [0], [1], [0, 0, 1, 1], [], []>} : vector<128x32xbf16>, vector<32x32xbf16>, vector<128x32xf32> -> vector<128x32xf32>
    %40 = arith.addf %35, %39 : vector<128x32xf32>
    %c1_43 = arith.constant 1 : index
    %c0_44 = arith.constant 0 : index
    %41 = vector.load %arg10[%c1_43, %c0_44] : memref<130x32xbf16, #tpu.memory_space<vmem>>, vector<128x32xbf16>
    %c1_45 = arith.constant 1 : index
    %c0_46 = arith.constant 0 : index
    %c0_47 = arith.constant 0 : index
    %42 = vector.load %arg4[%c1_45, %c0_46, %c0_47] : memref<3x32x32xbf16, #tpu.memory_space<vmem>>, vector<1x32x32xbf16>
    %43 = vector.shape_cast %42 : vector<1x32x32xbf16> to vector<32x32xbf16>
    %cst_48 = arith.constant dense<0.000000e+00> : vector<128x32xf32>
    %44 = tpu.matmul %41, %43, %cst_48 {dimension_numbers = #tpu.dot_dimension_numbers<[1], [0], [0], [1], [0, 0, 1, 1], [], []>} : vector<128x32xbf16>, vector<32x32xbf16>, vector<128x32xf32> -> vector<128x32xf32>
    %45 = arith.addf %40, %44 : vector<128x32xf32>
    %c2_49 = arith.constant 2 : index
    %c0_50 = arith.constant 0 : index
    %46 = vector.load %arg10[%c2_49, %c0_50] : memref<130x32xbf16, #tpu.memory_space<vmem>>, vector<128x32xbf16>
    %c2_51 = arith.constant 2 : index
    %c0_52 = arith.constant 0 : index
    %c0_53 = arith.constant 0 : index
    %47 = vector.load %arg4[%c2_51, %c0_52, %c0_53] : memref<3x32x32xbf16, #tpu.memory_space<vmem>>, vector<1x32x32xbf16>
    %48 = vector.shape_cast %47 : vector<1x32x32xbf16> to vector<32x32xbf16>
    %cst_54 = arith.constant dense<0.000000e+00> : vector<128x32xf32>
    %49 = tpu.matmul %46, %48, %cst_54 {dimension_numbers = #tpu.dot_dimension_numbers<[1], [0], [0], [1], [0, 0, 1, 1], [], []>} : vector<128x32xbf16>, vector<32x32xbf16>, vector<128x32xf32> -> vector<128x32xf32>
    %50 = arith.addf %45, %49 : vector<128x32xf32>
    %c0_55 = arith.constant 0 : index
    %c0_56 = arith.constant 0 : index
    %51 = vector.load %arg5[%c0_55, %c0_56] : memref<1x32xf32, #tpu.memory_space<vmem>>, vector<1x32xf32>
    %52 = vector.broadcast %51 : vector<1x32xf32> to vector<128x32xf32>
    %53 = arith.addf %50, %52 : vector<128x32xf32>
    %cst_57 = arith.constant 0.000000e+00 : f32
    %54 = vector.broadcast %cst_57 : f32 to vector<128x32xf32>
    %55 = arith.maximumf %53, %54 : vector<128x32xf32>
    %56 = arith.truncf %55 : vector<128x32xf32> to vector<128x32xbf16>
    %c1_58 = arith.constant 1 : index
    %c0_59 = arith.constant 0 : index
    %57 = vector.load %arg9[%c1_58, %c0_59] : memref<130x32xbf16, #tpu.memory_space<vmem>>, vector<128x32xbf16>
    tpu.vector_store %arg9[%c1_58, %c0_59], %56 {strides = array<i32>} : memref<130x32xbf16, #tpu.memory_space<vmem>>, vector<128x32xbf16>,
    %cst_60 = arith.constant 0.000000e+00 : f32
    %58 = vector.broadcast %cst_60 : f32 to vector<128x16xf32>
    %c0_61 = arith.constant 0 : index
    %c0_62 = arith.constant 0 : index
    %59 = vector.load %arg9[%c0_61, %c0_62] : memref<130x32xbf16, #tpu.memory_space<vmem>>, vector<128x32xbf16>
    %c0_63 = arith.constant 0 : index
    %c0_64 = arith.constant 0 : index
    %c0_65 = arith.constant 0 : index
    %60 = vector.load %arg6[%c0_63, %c0_64, %c0_65] : memref<3x32x16xbf16, #tpu.memory_space<vmem>>, vector<1x32x16xbf16>
    %61 = vector.shape_cast %60 : vector<1x32x16xbf16> to vector<32x16xbf16>
    %cst_66 = arith.constant dense<0.000000e+00> : vector<128x16xf32>
    %62 = tpu.matmul %59, %61, %cst_66 {dimension_numbers = #tpu.dot_dimension_numbers<[1], [0], [0], [1], [0, 0, 1, 1], [], []>} : vector<128x32xbf16>, vector<32x16xbf16>, vector<128x16xf32> -> vector<128x16xf32>
    %63 = arith.addf %58, %62 : vector<128x16xf32>
    %c1_67 = arith.constant 1 : index
    %c0_68 = arith.constant 0 : index
    %64 = vector.load %arg9[%c1_67, %c0_68] : memref<130x32xbf16, #tpu.memory_space<vmem>>, vector<128x32xbf16>
    %c1_69 = arith.constant 1 : index
    %c0_70 = arith.constant 0 : index
    %c0_71 = arith.constant 0 : index
    %65 = vector.load %arg6[%c1_69, %c0_70, %c0_71] : memref<3x32x16xbf16, #tpu.memory_space<vmem>>, vector<1x32x16xbf16>
    %66 = vector.shape_cast %65 : vector<1x32x16xbf16> to vector<32x16xbf16>
    %cst_72 = arith.constant dense<0.000000e+00> : vector<128x16xf32>
    %67 = tpu.matmul %64, %66, %cst_72 {dimension_numbers = #tpu.dot_dimension_numbers<[1], [0], [0], [1], [0, 0, 1, 1], [], []>} : vector<128x32xbf16>, vector<32x16xbf16>, vector<128x16xf32> -> vector<128x16xf32>
    %68 = arith.addf %63, %67 : vector<128x16xf32>
    %c2_73 = arith.constant 2 : index
    %c0_74 = arith.constant 0 : index
    %69 = vector.load %arg9[%c2_73, %c0_74] : memref<130x32xbf16, #tpu.memory_space<vmem>>, vector<128x32xbf16>
    %c2_75 = arith.constant 2 : index
    %c0_76 = arith.constant 0 : index
    %c0_77 = arith.constant 0 : index
    %70 = vector.load %arg6[%c2_75, %c0_76, %c0_77] : memref<3x32x16xbf16, #tpu.memory_space<vmem>>, vector<1x32x16xbf16>
    %71 = vector.shape_cast %70 : vector<1x32x16xbf16> to vector<32x16xbf16>
    %cst_78 = arith.constant dense<0.000000e+00> : vector<128x16xf32>
    %72 = tpu.matmul %69, %71, %cst_78 {dimension_numbers = #tpu.dot_dimension_numbers<[1], [0], [0], [1], [0, 0, 1, 1], [], []>} : vector<128x32xbf16>, vector<32x16xbf16>, vector<128x16xf32> -> vector<128x16xf32>
    %73 = arith.addf %68, %72 : vector<128x16xf32>
    %c0_79 = arith.constant 0 : index
    %c0_80 = arith.constant 0 : index
    %74 = vector.load %arg7[%c0_79, %c0_80] : memref<1x16xf32, #tpu.memory_space<vmem>>, vector<1x16xf32>
    %75 = vector.broadcast %74 : vector<1x16xf32> to vector<128x16xf32>
    %76 = arith.addf %73, %75 : vector<128x16xf32>
    %c0_81 = arith.constant 0 : index
    %c0_82 = arith.constant 0 : index
    %c0_83 = arith.constant 0 : index
    %77 = vector.load %arg8[%c0_81, %c0_82, %c0_83] : memref<1x128x16xf32, #tpu.memory_space<vmem>>, vector<1x128x16xf32>
    %78 = vector.shape_cast %77 : vector<1x128x16xf32> to vector<128x16xf32>
    %79 = vector.shape_cast %76 : vector<128x16xf32> to vector<1x128x16xf32>
    tpu.vector_store %arg8[%c0_81, %c0_82, %c0_83], %79 {strides = array<i32>} : memref<1x128x16xf32, #tpu.memory_space<vmem>>, vector<1x128x16xf32>,
    return
  }
  func.func @transform_0(%arg0: i32) -> (i32, i32, i32) {
    %c0_i32 = arith.constant 0 : i32
    %c0_i32_0 = arith.constant 0 : i32
    %c0_i32_1 = arith.constant 0 : i32
    return %arg0, %c0_i32, %c0_i32_0 : i32, i32, i32
  }
  func.func @transform_1(%arg0: i32) -> (i32, i32, i32) {
    %c0_i32 = arith.constant 0 : i32
    %c0_i32_0 = arith.constant 0 : i32
    %c0_i32_1 = arith.constant 0 : i32
    %c0_i32_2 = arith.constant 0 : i32
    return %c0_i32, %c0_i32_0, %c0_i32_1 : i32, i32, i32
  }
  func.func @transform_2(%arg0: i32) -> (i32, i32) {
    %c0_i32 = arith.constant 0 : i32
    %c0_i32_0 = arith.constant 0 : i32
    %c0_i32_1 = arith.constant 0 : i32
    return %c0_i32, %c0_i32_0 : i32, i32
  }
  func.func @transform_3(%arg0: i32) -> (i32, i32, i32) {
    %c0_i32 = arith.constant 0 : i32
    %c0_i32_0 = arith.constant 0 : i32
    %c0_i32_1 = arith.constant 0 : i32
    %c0_i32_2 = arith.constant 0 : i32
    return %c0_i32, %c0_i32_0, %c0_i32_1 : i32, i32, i32
  }
  func.func @transform_4(%arg0: i32) -> (i32, i32) {
    %c0_i32 = arith.constant 0 : i32
    %c0_i32_0 = arith.constant 0 : i32
    %c0_i32_1 = arith.constant 0 : i32
    return %c0_i32, %c0_i32_0 : i32, i32
  }
  func.func @transform_5(%arg0: i32) -> (i32, i32, i32) {
    %c0_i32 = arith.constant 0 : i32
    %c0_i32_0 = arith.constant 0 : i32
    %c0_i32_1 = arith.constant 0 : i32
    %c0_i32_2 = arith.constant 0 : i32
    return %c0_i32, %c0_i32_0, %c0_i32_1 : i32, i32, i32
  }
  func.func @transform_6(%arg0: i32) -> (i32, i32) {
    %c0_i32 = arith.constant 0 : i32
    %c0_i32_0 = arith.constant 0 : i32
    %c0_i32_1 = arith.constant 0 : i32
    return %c0_i32, %c0_i32_0 : i32, i32
  }
  func.func @transform_7(%arg0: i32) -> (i32, i32, i32) {
    %c0_i32 = arith.constant 0 : i32
    %c0_i32_0 = arith.constant 0 : i32
    %c0_i32_1 = arith.constant 0 : i32
    return %arg0, %c0_i32, %c0_i32_0 : i32, i32, i32
  }
}

</mosaic_0001>

<llo_original>
// kernel: tpu_custom_call.1
$region0: #{tpu_custom_call.1}
  #allocation0 [shape = 'u32[]', space=smem, size = 0x4, offset = 0x4, fixed_abs, tag = 'smem constant byte address 0x4 - core index']
  #allocation1 [shape = 'u32[144,128]{1,0:T(1,128)}', space=vmem, size = 0x12000, scoped, tag = 'internal scratch']
  #allocation2 [shape = 'bf16[130,32]{1,0:T(8,128)(2,1)}', space=vmem, size = 0x8800, scoped, tag = 'scratch operand']
  #allocation3 [shape = 'bf16[130,32]{1,0:T(8,128)(2,1)}', space=vmem, size = 0x8800, scoped, tag = 'scratch operand']
  %s0 = inlined_call_operand.vmem [shape: f32[2,128,32], index: 0, kind: input, shape index: {}]
  %s1 = inlined_call_operand.vmem [shape: bf16[3,32,32], index: 1, kind: input, shape index: {}]
  %s2 = inlined_call_operand.vmem [shape: f32[1,32], index: 2, kind: input, shape index: {}]
  %s3 = inlined_call_operand.vmem [shape: bf16[3,32,32], index: 3, kind: input, shape index: {}]
  %s4 = inlined_call_operand.vmem [shape: f32[1,32], index: 4, kind: input, shape index: {}]
  %s5 = inlined_call_operand.vmem [shape: bf16[3,32,16], index: 5, kind: input, shape index: {}]
  %s6 = inlined_call_operand.vmem [shape: f32[1,16], index: 6, kind: input, shape index: {}]
  %s7 = inlined_call_operand.vmem [shape: f32[2,128,16], index: 7, kind: output, shape index: {}]
  %s8 = sld [smem:[#allocation0]]
  $region61: #{tpu_custom_call.1} parent=0
    _
  %s10 = ssub.s32 1, %s8
  %s11 = scalar_select 0, %s10, %s8
  loop: start=0, step=1, limit=4
  $region2: #{tpu_custom_call.1} parent=0 // loop_pre_header
    _
  $region3: #{tpu_custom_call.1} parent=0 // loop_header
    %s13 = sphi 0, %s17
    %p14 = scmp.ge.s32.totalorder %s13, 4
    %s23 = sphi 0, %s25
    %s26 = sphi 0, %s23
    %s27 = sphi 0, %s26
    %s43 = sphi 0, %s27
    %s47 = sphi 0, %s47
    %s49 = sphi 0, %s47
    %s50 = sphi 0, %s49
    %s64 = sphi 0, %s50
    %s68 = sphi 0, %s68
    %s70 = sphi 0, %s68
    %s71 = sphi 0, %s70
    %s85 = sphi 0, %s71
    %s89 = sphi 0, %s89
    %s91 = sphi 0, %s89
    %s92 = sphi 0, %s91
    %s106 = sphi 0, %s92
    %s110 = sphi 0, %s110
    %s112 = sphi 0, %s110
    %s113 = sphi 0, %s112
    %s127 = sphi 0, %s113
    %s131 = sphi 0, %s131
    %s133 = sphi 0, %s131
    %s134 = sphi 0, %s133
    %s148 = sphi 0, %s134
    %s152 = sphi 0, %s152
    %s154 = sphi 0, %s152
    %s155 = sphi 0, %s154
    %s169 = sphi 0, %s155
    %s175 = sphi 0, %s177
    %s178 = sphi 0, %s175
    %s179 = sphi 0, %s178
    %s195 = sphi 0, %s179
  $region4: #{tpu_custom_call.1} parent=0 // loop_header_branch
    %16 = sbr.rel (%p14) target = $region8
  $region5: #{tpu_custom_call.1} parent=0 // loop_body
    %s18 = ssub.s32 %s13, 1
    %s19 = ssub.s32 %s13, 2
    %s20 = sadd.s32 %s13, 1
    %s21 = ssub.s32 %s13, %s20
    %p22 = scmp.eq.s32.totalorder %s21, 0
    %s24 = sadd.s32 %s23, 1
    %s25 = scalar_select %p22, %s23, %s24
    %p28 = pneg %p22
    %p29 = scmp.eq.s32.totalorder %s13, 1
    %p30 = por %p28, %p29
    %p31 = scmp.ne.s32.totalorder %s23, %s26
    %p32 = scmp.eq.s32.totalorder %s13, 0
    %p33 = por %p31, %p32
    %p34 = scmp.ne.s32.totalorder %s23, %s26
    %p35 = scmp.eq.s32.totalorder %s18, 1
    %p36 = por %p34, %p35
    %p37 = scmp.ne.s32.totalorder %s26, %s27
    %p38 = scmp.eq.s32.totalorder %s18, 0
    %p39 = por %p37, %p38
    %p40 = scmp.ne.s32.totalorder %s26, %s27
    %p41 = scmp.eq.s32.totalorder %s19, 1
    %p42 = por %p40, %p41
    %p44 = scmp.ne.s32.totalorder %s27, %s43
    %p45 = scmp.eq.s32.totalorder %s19, 0
    %p46 = por %p44, %p45
    %s48 = sadd.s32 %s47, 1
    %p51 = scmp.eq.s32.totalorder %s13, 1
    %p52 = scmp.ne.s32.totalorder %s47, %s49
    %p53 = scmp.eq.s32.totalorder %s13, 0
    %p54 = por %p52, %p53
    %p55 = scmp.ne.s32.totalorder %s47, %s49
    %p56 = scmp.eq.s32.totalorder %s18, 1
    %p57 = por %p55, %p56
    %p58 = scmp.ne.s32.totalorder %s49, %s50
    %p59 = scmp.eq.s32.totalorder %s18, 0
    %p60 = por %p58, %p59
    %p61 = scmp.ne.s32.totalorder %s49, %s50
    %p62 = scmp.eq.s32.totalorder %s19, 1
    %p63 = por %p61, %p62
    %p65 = scmp.ne.s32.totalorder %s50, %s64
    %p66 = scmp.eq.s32.totalorder %s19, 0
    %p67 = por %p65, %p66
    %s69 = sadd.s32 %s68, 1
    %p72 = scmp.eq.s32.totalorder %s13, 1
    %p73 = scmp.ne.s32.totalorder %s68, %s70
    %p74 = scmp.eq.s32.totalorder %s13, 0
    %p75 = por %p73, %p74
    %p76 = scmp.ne.s32.totalorder %s68, %s70
    %p77 = scmp.eq.s32.totalorder %s18, 1
    %p78 = por %p76, %p77
    %p79 = scmp.ne.s32.totalorder %s70, %s71
    %p80 = scmp.eq.s32.totalorder %s18, 0
    %p81 = por %p79, %p80
    %p82 = scmp.ne.s32.totalorder %s70, %s71
    %p83 = scmp.eq.s32.totalorder %s19, 1
    %p84 = por %p82, %p83
    %p86 = scmp.ne.s32.totalorder %s71, %s85
    %p87 = scmp.eq.s32.totalorder %s19, 0
    %p88 = por %p86, %p87
    %s90 = sadd.s32 %s89, 1
    %p93 = scmp.eq.s32.totalorder %s13, 1
    %p94 = scmp.ne.s32.totalorder %s89, %s91
    %p95 = scmp.eq.s32.totalorder %s13, 0
    %p96 = por %p94, %p95
    %p97 = scmp.ne.s32.totalorder %s89, %s91
    %p98 = scmp.eq.s32.totalorder %s18, 1
    %p99 = por %p97, %p98
    %p100 = scmp.ne.s32.totalorder %s91, %s92
    %p101 = scmp.eq.s32.totalorder %s18, 0
    %p102 = por %p100, %p101
    %p103 = scmp.ne.s32.totalorder %s91, %s92
    %p104 = scmp.eq.s32.totalorder %s19, 1
    %p105 = por %p103, %p104
    %p107 = scmp.ne.s32.totalorder %s92, %s106
    %p108 = scmp.eq.s32.totalorder %s19, 0
    %p109 = por %p107, %p108
    %s111 = sadd.s32 %s110, 1
    %p114 = scmp.eq.s32.totalorder %s13, 1
    %p115 = scmp.ne.s32.totalorder %s110, %s112
    %p116 = scmp.eq.s32.totalorder %s13, 0
    %p117 = por %p115, %p116
    %p118 = scmp.ne.s32.totalorder %s110, %s112
    %p119 = scmp.eq.s32.totalorder %s18, 1
    %p120 = por %p118, %p119
    %p121 = scmp.ne.s32.totalorder %s112, %s113
    %p122 = scmp.eq.s32.totalorder %s18, 0
    %p123 = por %p121, %p122
    %p124 = scmp.ne.s32.totalorder %s112, %s113
    %p125 = scmp.eq.s32.totalorder %s19, 1
    %p126 = por %p124, %p125
    %p128 = scmp.ne.s32.totalorder %s113, %s127
    %p129 = scmp.eq.s32.totalorder %s19, 0
    %p130 = por %p128, %p129
    %s132 = sadd.s32 %s131, 1
    %p135 = scmp.eq.s32.totalorder %s13, 1
    %p136 = scmp.ne.s32.totalorder %s131, %s133
    %p137 = scmp.eq.s32.totalorder %s13, 0
    %p138 = por %p136, %p137
    %p139 = scmp.ne.s32.totalorder %s131, %s133
    %p140 = scmp.eq.s32.totalorder %s18, 1
    %p141 = por %p139, %p140
    %p142 = scmp.ne.s32.totalorder %s133, %s134
    %p143 = scmp.eq.s32.totalorder %s18, 0
    %p144 = por %p142, %p143
    %p145 = scmp.ne.s32.totalorder %s133, %s134
    %p146 = scmp.eq.s32.totalorder %s19, 1
    %p147 = por %p145, %p146
    %p149 = scmp.ne.s32.totalorder %s134, %s148
    %p150 = scmp.eq.s32.totalorder %s19, 0
    %p151 = por %p149, %p150
    %s153 = sadd.s32 %s152, 1
    %p156 = scmp.eq.s32.totalorder %s13, 1
    %p157 = scmp.ne.s32.totalorder %s152, %s154
    %p158 = scmp.eq.s32.totalorder %s13, 0
    %p159 = por %p157, %p158
    %p160 = scmp.ne.s32.totalorder %s152, %s154
    %p161 = scmp.eq.s32.totalorder %s18, 1
    %p162 = por %p160, %p161
    %p163 = scmp.ne.s32.totalorder %s154, %s155
    %p164 = scmp.eq.s32.totalorder %s18, 0
    %p165 = por %p163, %p164
    %p166 = scmp.ne.s32.totalorder %s154, %s155
    %p167 = scmp.eq.s32.totalorder %s19, 1
    %p168 = por %p166, %p167
    %p170 = scmp.ne.s32.totalorder %s155, %s169
    %p171 = scmp.eq.s32.totalorder %s19, 0
    %p172 = por %p170, %p171
    %s173 = ssub.s32 %s13, %s20
    %p174 = scmp.eq.s32.totalorder %s173, 0
    %s176 = sadd.s32 %s175, 1
    %s177 = scalar_select %p174, %s175, %s176
    %p180 = pneg %p174
    %p181 = scmp.eq.s32.totalorder %s13, 1
    %p182 = por %p180, %p181
    %p183 = scmp.ne.s32.totalorder %s175, %s178
    %p184 = scmp.eq.s32.totalorder %s13, 0
    %p185 = por %p183, %p184
    %p186 = scmp.ne.s32.totalorder %s175, %s178
    %p187 = scmp.eq.s32.totalorder %s18, 1
    %p188 = por %p186, %p187
    %p189 = scmp.ne.s32.totalorder %s178, %s179
    %p190 = scmp.eq.s32.totalorder %s18, 0
    %p191 = por %p189, %p190
    %p192 = scmp.ne.s32.totalorder %s178, %s179
    %p193 = scmp.eq.s32.totalorder %s19, 1
    %p194 = por %p192, %p193
    %p196 = scmp.ne.s32.totalorder %s179, %s195
    %p197 = scmp.eq.s32.totalorder %s19, 0
    %p198 = por %p196, %p197
    %p199 = scmp.le.s32.totalorder 1, %s13
    %p200 = scmp.lt.s32.totalorder %s13, 3
    %p201 = pnand %p199, %p200
    %p202 = pneg %p201
    // Predicated region
    $region9: #{tpu_custom_call.1} parent=5 // pred_check
      _
    $region10: #{tpu_custom_call.1} parent=5 // pred_check_branch
      %204 = sbr.rel (%p201) target = $region12
    $region11: #{tpu_custom_call.1} parent=5 // pred_region
      %s205 = ssub.s32 %s13, 1
      // Predicated region
      $region13: #{tpu_custom_call.1} parent=11 // pred_check
        %p206 = pneg %p60
      $region14: #{tpu_custom_call.1} parent=11 // pred_check_branch
        %208 = sbr.rel (%p206) target = $region16
      $region15: #{tpu_custom_call.1} parent=11 // pred_region
        _
      $region16: #{tpu_custom_call.1} parent=11 // pred_fallthru
        _
      // Predicated region
      $region17: #{tpu_custom_call.1} parent=11 // pred_check
        %p209 = pneg %p81
      $region18: #{tpu_custom_call.1} parent=11 // pred_check_branch
        %211 = sbr.rel (%p209) target = $region20
      $region19: #{tpu_custom_call.1} parent=11 // pred_region
        _
      $region20: #{tpu_custom_call.1} parent=11 // pred_fallthru
        _
      // Predicated region
      $region21: #{tpu_custom_call.1} parent=11 // pred_check
        %p212 = pneg %p102
      $region22: #{tpu_custom_call.1} parent=11 // pred_check_branch
        %214 = sbr.rel (%p212) target = $region24
      $region23: #{tpu_custom_call.1} parent=11 // pred_region
        _
      $region24: #{tpu_custom_call.1} parent=11 // pred_fallthru
        _
      // Predicated region
      $region25: #{tpu_custom_call.1} parent=11 // pred_check
        %p215 = pneg %p123
      $region26: #{tpu_custom_call.1} parent=11 // pred_check_branch
        %217 = sbr.rel (%p215) target = $region28
      $region27: #{tpu_custom_call.1} parent=11 // pred_region
        _
      $region28: #{tpu_custom_call.1} parent=11 // pred_fallthru
        _
      // Predicated region
      $region29: #{tpu_custom_call.1} parent=11 // pred_check
        %p218 = pneg %p144
      $region30: #{tpu_custom_call.1} parent=11 // pred_check_branch
        %220 = sbr.rel (%p218) target = $region32
      $region31: #{tpu_custom_call.1} parent=11 // pred_region
        _
      $region32: #{tpu_custom_call.1} parent=11 // pred_fallthru
        _
      // Predicated region
      $region33: #{tpu_custom_call.1} parent=11 // pred_check
        %p221 = pneg %p165
      $region34: #{tpu_custom_call.1} parent=11 // pred_check_branch
        %223 = sbr.rel (%p221) target = $region36
      $region35: #{tpu_custom_call.1} parent=11 // pred_region
        _
      $region36: #{tpu_custom_call.1} parent=11 // pred_fallthru
        _
    $region12: #{tpu_custom_call.1} parent=5 // pred_fallthru
      _
    %p224 = scmp.lt.s32.totalorder %s13, 2
    // Predicated region
    $region37: #{tpu_custom_call.1} parent=5 // pred_check
      %p225 = pneg %p224
    $region38: #{tpu_custom_call.1} parent=5 // pred_check_branch
      %227 = sbr.rel (%p225) target = $region40
    $region39: #{tpu_custom_call.1} parent=5 // pred_region
      // Predicated region
      $region41: #{tpu_custom_call.1} parent=39 // pred_check
        %p228 = pneg %p33
      $region42: #{tpu_custom_call.1} parent=39 // pred_check_branch
        %230 = sbr.rel (%p228) target = $region44
      $region43: #{tpu_custom_call.1} parent=39 // pred_region
        %p231 = scmp.lt.s32.totalorder %s13, 1
        %s232 = scalar_select %p231, %s13, 1
        %s233 = smul.addr %s232, 16
        %s234 = smul.addr %s233, 8
        %s235 = scalar_lea.vmem %s0, %s234
      $region44: #{tpu_custom_call.1} parent=39 // pred_fallthru
        _
    $region40: #{tpu_custom_call.1} parent=5 // pred_fallthru
      _
    %p236 = scmp.le.s32.totalorder 1, %s13
    %p237 = scmp.lt.s32.totalorder %s13, 3
    %p238 = pnand %p236, %p237
    %p239 = pneg %p238
    // Predicated region
    $region45: #{tpu_custom_call.1} parent=5 // pred_check
      _
    $region46: #{tpu_custom_call.1} parent=5 // pred_check_branch
      %241 = sbr.rel (%p238) target = $region48
    $region47: #{tpu_custom_call.1} parent=5 // pred_region
      %s242 = ssub.s32 %s13, 1
      %p243 = scmp.lt.s32.totalorder %s18, 1
      %s244 = scalar_select %p243, %s18, 1
      %s245 = smul.addr %s244, 16
      %s246 = smul.addr %s245, 8
      %s247 = scalar_lea.vmem %s0, %s246
      %p248 = pneg %p39
      %p249 = pneg %p36
      %p250 = pneg %p60
      %p251 = pneg %p57
      %p252 = pneg %p81
      %p253 = pneg %p78
      %p254 = pneg %p102
      %p255 = pneg %p99
      %p256 = pneg %p123
      %p257 = pneg %p120
      %p258 = pneg %p144
      %p259 = pneg %p141
      %p260 = pneg %p165
      %p261 = pneg %p162
      %p262 = pneg %p191
      %p263 = pneg %p188
      %p264 = scmp.lt.s32.totalorder %s18, 1
      %s265 = scalar_select %p264, %s18, 1
      %s266 = smul.addr %s265, 16
      %s267 = smul.addr %s266, 8
      %s268 = scalar_lea.vmem %s7, %s267
      %p269 = scmp.lt.s32.totalorder %s18, 1
      %s270 = scalar_select %p269, %s18, 1
      %s271 = smul.addr %s270, 16
      %s272 = smul.addr %s271, 8
      %s273 = scalar_lea.vmem %s0, %s272
      %p274 = scmp.lt.s32.totalorder %s18, 1
      %s275 = scalar_select %p274, %s18, 1
      %s276 = smul.addr %s275, 16
      %s277 = smul.addr %s276, 8
      %s278 = scalar_lea.vmem %s7, %s277
      %vm280 = vcmask 253952
      %vm281 = vsmask.f32 256
      %vm282 = vmand %vm280, %vm281
      %v283 = vld [vmem:[#allocation2] sm:$0x1]
      %v284 = vsel %vm282, 0, %v283
      %285 = vst [vmem:[#allocation2] sm:$0x1] %v284
      %vm286 = vsmask.f32 7938
      %vm287 = vmand %vm280, %vm286
      %v288 = vld [vmem:[#allocation2 + $0x40] sm:$0x1]
      %v289 = vsel %vm287, 0, %v288
      %290 = vst [vmem:[#allocation2 + $0x40] sm:$0x1] %v289
      %v291 = vld [vmem:[#allocation3] sm:$0x1]
      %v292 = vsel %vm282, 0, %v291
      %293 = vst [vmem:[#allocation3] sm:$0x1] %v292
      %v294 = vld [vmem:[#allocation3 + $0x40] sm:$0x1]
      %v295 = vsel %vm287, 0, %v294
      %296 = vst [vmem:[#allocation3 + $0x40] sm:$0x1] %v295
      %v297 = vld [vmem:[%s273] sm:$0xff]
      %v298 = vld [vmem:[%s273 + $0x8] sm:$0xff]
      %v299 = vld [vmem:[%s273 + $0x10] sm:$0xff]
      %v300 = vld [vmem:[%s273 + $0x18] sm:$0xff]
      %v301 = vld [vmem:[%s273 + $0x20] sm:$0xff]
      %v302 = vld [vmem:[%s273 + $0x28] sm:$0xff]
      %v303 = vld [vmem:[%s273 + $0x30] sm:$0xff]
      %v304 = vld [vmem:[%s273 + $0x38] sm:$0xff]
      %v305 = vld [vmem:[%s273 + $0x40] sm:$0xff]
      %v306 = vld [vmem:[%s273 + $0x48] sm:$0xff]
      %v307 = vld [vmem:[%s273 + $0x50] sm:$0xff]
      %v308 = vld [vmem:[%s273 + $0x58] sm:$0xff]
      %v309 = vld [vmem:[%s273 + $0x60] sm:$0xff]
      %v310 = vld [vmem:[%s273 + $0x68] sm:$0xff]
      %v311 = vld [vmem:[%s273 + $0x70] sm:$0xff]
      %v312 = vld [vmem:[%s273 + $0x78] sm:$0xff]
      %v313 = vpack.c.bf16 %v298, %v297
      %v314 = vpack.c.bf16 %v300, %v299
      %v315 = vpack.c.bf16 %v302, %v301
      %v316 = vpack.c.bf16 %v304, %v303
      %v317 = vpack.c.bf16 %v306, %v305
      %v318 = vpack.c.bf16 %v308, %v307
      %v319 = vpack.c.bf16 %v310, %v309
      %v320 = vpack.c.bf16 %v312, %v311
      %v329 = vunpack.c.l.b16 %v313
      %v330 = vunpack.c.h.b16 %v313
      %v331 = vunpack.c.l.b16 %v314
      %v332 = vunpack.c.h.b16 %v314
      %v333 = vunpack.c.l.b16 %v315
      %v334 = vunpack.c.h.b16 %v315
      %v335 = vunpack.c.l.b16 %v316
      %v336 = vunpack.c.h.b16 %v316
      %v337 = vunpack.c.l.b16 %v317
      %v338 = vunpack.c.h.b16 %v317
      %v339 = vunpack.c.l.b16 %v318
      %v340 = vunpack.c.h.b16 %v318
      %v341 = vunpack.c.l.b16 %v319
      %v342 = vunpack.c.h.b16 %v319
      %v343 = vunpack.c.l.b16 %v320
      %v344 = vunpack.c.h.b16 %v320
      %v345 = vpack.c.b16 %v329, %v329
      %v346 = vpack.c.b16 %v330, %v330
      %v347 = vpack.c.b16 %v331, %v331
      %v348 = vpack.c.b16 %v332, %v332
      %v349 = vpack.c.b16 %v333, %v333
      %v350 = vpack.c.b16 %v334, %v334
      %v351 = vpack.c.b16 %v335, %v335
      %v352 = vpack.c.b16 %v336, %v336
      %v353 = vpack.c.b16 %v337, %v337
      %v354 = vpack.c.b16 %v338, %v338
      %v355 = vpack.c.b16 %v339, %v339
      %v356 = vpack.c.b16 %v340, %v340
      %v357 = vpack.c.b16 %v341, %v341
      %v358 = vpack.c.b16 %v342, %v342
      %v359 = vpack.c.b16 %v343, %v343
      %v360 = vpack.c.b16 %v344, %v344
      %vm361 = vsmask.f32 4368
      %vm362 = vmor %vm281, %vm361
      %v364 = vshrl.u32 %v345, 16
      %v366 = vrot.slane %v364, 7
      %v367 = vshll.u32 %v345, 16
      %v369 = vor.u32 %v366, %v367
      %v370 = vrot.slane %v366, 4
      %v372 = vshrl.u32 %v346, 16
      %v374 = vrot.slane %v372, 7
      %v375 = vshll.u32 %v346, 16
      %v377 = vor.u32 %v374, %v375
      %v378 = vsel %vm362, %v370, %v377
      %v379 = vrot.slane %v374, 4
      %v381 = vshrl.u32 %v347, 16
      %v383 = vrot.slane %v381, 7
      %v384 = vshll.u32 %v347, 16
      %v386 = vor.u32 %v383, %v384
      %v387 = vsel %vm362, %v379, %v386
      %v388 = vrot.slane %v383, 4
      %v390 = vshrl.u32 %v348, 16
      %v392 = vrot.slane %v390, 7
      %v393 = vshll.u32 %v348, 16
      %v395 = vor.u32 %v392, %v393
      %v396 = vsel %vm362, %v388, %v395
      %v397 = vrot.slane %v392, 4
      %v399 = vshrl.u32 %v349, 16
      %v401 = vrot.slane %v399, 7
      %v402 = vshll.u32 %v349, 16
      %v404 = vor.u32 %v401, %v402
      %v405 = vsel %vm362, %v397, %v404
      %v406 = vrot.slane %v401, 4
      %v408 = vshrl.u32 %v350, 16
      %v410 = vrot.slane %v408, 7
      %v411 = vshll.u32 %v350, 16
      %v413 = vor.u32 %v410, %v411
      %v414 = vsel %vm362, %v406, %v413
      %v415 = vrot.slane %v410, 4
      %v417 = vshrl.u32 %v351, 16
      %v419 = vrot.slane %v417, 7
      %v420 = vshll.u32 %v351, 16
      %v422 = vor.u32 %v419, %v420
      %v423 = vsel %vm362, %v415, %v422
      %v424 = vrot.slane %v419, 4
      %v426 = vshrl.u32 %v352, 16
      %v428 = vrot.slane %v426, 7
      %v429 = vshll.u32 %v352, 16
      %v431 = vor.u32 %v428, %v429
      %v432 = vsel %vm362, %v424, %v431
      %v433 = vrot.slane %v428, 4
      %v435 = vshrl.u32 %v353, 16
      %v437 = vrot.slane %v435, 7
      %v438 = vshll.u32 %v353, 16
      %v440 = vor.u32 %v437, %v438
      %v441 = vsel %vm362, %v433, %v440
      %v442 = vrot.slane %v437, 4
      %v444 = vshrl.u32 %v354, 16
      %v446 = vrot.slane %v444, 7
      %v447 = vshll.u32 %v354, 16
      %v449 = vor.u32 %v446, %v447
      %v450 = vsel %vm362, %v442, %v449
      %v451 = vrot.slane %v446, 4
      %v453 = vshrl.u32 %v355, 16
      %v455 = vrot.slane %v453, 7
      %v456 = vshll.u32 %v355, 16
      %v458 = vor.u32 %v455, %v456
      %v459 = vsel %vm362, %v451, %v458
      %v460 = vrot.slane %v455, 4
      %v462 = vshrl.u32 %v356, 16
      %v464 = vrot.slane %v462, 7
      %v465 = vshll.u32 %v356, 16
      %v467 = vor.u32 %v464, %v465
      %v468 = vsel %vm362, %v460, %v467
      %v469 = vrot.slane %v464, 4
      %v471 = vshrl.u32 %v357, 16
      %v473 = vrot.slane %v471, 7
      %v474 = vshll.u32 %v357, 16
      %v476 = vor.u32 %v473, %v474
      %v477 = vsel %vm362, %v469, %v476
      %v478 = vrot.slane %v473, 4
      %v480 = vshrl.u32 %v358, 16
      %v482 = vrot.slane %v480, 7
      %v483 = vshll.u32 %v358, 16
      %v485 = vor.u32 %v482, %v483
      %v486 = vsel %vm362, %v478, %v485
      %v487 = vrot.slane %v482, 4
      %v489 = vshrl.u32 %v359, 16
      %v491 = vrot.slane %v489, 7
      %v492 = vshll.u32 %v359, 16
      %v494 = vor.u32 %v491, %v492
      %v495 = vsel %vm362, %v487, %v494
      %v496 = vrot.slane %v491, 4
      %v498 = vshrl.u32 %v360, 16
      %v500 = vrot.slane %v498, 7
      %v501 = vshll.u32 %v360, 16
      %v503 = vor.u32 %v500, %v501
      %v504 = vsel %vm362, %v496, %v503
      %v505 = vrot.slane %v500, 4
      %vm523 = vcmask 257024
      %vm524 = vmand %vm523, %vm286
      %v525 = vld [vmem:[#allocation2] sm:$0xf]
      %v526 = vsel %vm524, %v369, %v525
      %527 = vst [vmem:[#allocation2] sm:$0xf] %v526
      %vm528 = vcmask 257024
      %529 = vst.msk [vmem:[#allocation2 + $0x4] sm:$0xf] %vm528, %v378
      %530 = vst.msk [vmem:[#allocation2 + $0x8] sm:$0xf] %vm528, %v387
      %531 = vst.msk [vmem:[#allocation2 + $0xc] sm:$0xf] %vm528, %v396
      %532 = vst.msk [vmem:[#allocation2 + $0x10] sm:$0xf] %vm528, %v405
      %533 = vst.msk [vmem:[#allocation2 + $0x14] sm:$0xf] %vm528, %v414
      %534 = vst.msk [vmem:[#allocation2 + $0x18] sm:$0xf] %vm528, %v423
      %535 = vst.msk [vmem:[#allocation2 + $0x1c] sm:$0xf] %vm528, %v432
      %536 = vst.msk [vmem:[#allocation2 + $0x20] sm:$0xf] %vm528, %v441
      %537 = vst.msk [vmem:[#allocation2 + $0x24] sm:$0xf] %vm528, %v450
      %538 = vst.msk [vmem:[#allocation2 + $0x28] sm:$0xf] %vm528, %v459
      %539 = vst.msk [vmem:[#allocation2 + $0x2c] sm:$0xf] %vm528, %v468
      %540 = vst.msk [vmem:[#allocation2 + $0x30] sm:$0xf] %vm528, %v477
      %541 = vst.msk [vmem:[#allocation2 + $0x34] sm:$0xf] %vm528, %v486
      %542 = vst.msk [vmem:[#allocation2 + $0x38] sm:$0xf] %vm528, %v495
      %543 = vst.msk [vmem:[#allocation2 + $0x3c] sm:$0xf] %vm528, %v504
      %v544 = vld [vmem:[#allocation2 + $0x40] sm:$0x1]
      %v545 = vsel %vm282, %v505, %v544
      %546 = vst [vmem:[#allocation2 + $0x40] sm:$0x1] %v545
      %v547 = vld [vmem:[#allocation2] sm:$0xf]
      %v548 = vld [vmem:[#allocation2 + $0x4] sm:$0xf]
      %v549 = vld [vmem:[#allocation2 + $0x8] sm:$0xf]
      %v550 = vld [vmem:[#allocation2 + $0xc] sm:$0xf]
      %v551 = vld [vmem:[#allocation2 + $0x10] sm:$0xf]
      %v552 = vld [vmem:[#allocation2 + $0x14] sm:$0xf]
      %v553 = vld [vmem:[#allocation2 + $0x18] sm:$0xf]
      %v554 = vld [vmem:[#allocation2 + $0x1c] sm:$0xf]
      %v555 = vld [vmem:[#allocation2 + $0x20] sm:$0xf]
      %v556 = vld [vmem:[#allocation2 + $0x24] sm:$0xf]
      %v557 = vld [vmem:[#allocation2 + $0x28] sm:$0xf]
      %v558 = vld [vmem:[#allocation2 + $0x2c] sm:$0xf]
      %v559 = vld [vmem:[#allocation2 + $0x30] sm:$0xf]
      %v560 = vld [vmem:[#allocation2 + $0x34] sm:$0xf]
      %v561 = vld [vmem:[#allocation2 + $0x38] sm:$0xf]
      %v562 = vld [vmem:[#allocation2 + $0x3c] sm:$0xf]
      %v563 = vld [vmem:[%s1] sm:$0xf]
      %v564 = vld [vmem:[%s1 + $0x4] sm:$0xf]
      %v565 = vld [vmem:[%s1 + $0x8] sm:$0xf]
      %v566 = vld [vmem:[%s1 + $0xc] sm:$0xf]
      %v567 = vld [vmem:[#allocation2 + $0x40] sm:$0x1]
      %s568 = scalar_lea.vmem %s1, 16
      %v569 = vld [vmem:[%s568] sm:$0xf]
      %v570 = vld [vmem:[%s568 + $0x4] sm:$0xf]
      %v571 = vld [vmem:[%s568 + $0x8] sm:$0xf]
      %v572 = vld [vmem:[%s568 + $0xc] sm:$0xf]
      %v590 = vunpack.c.l.b16 %v547
      %v591 = vunpack.c.l.b16 %v548
      %v592 = vunpack.c.l.b16 %v549
      %v593 = vunpack.c.l.b16 %v550
      %v594 = vunpack.c.l.b16 %v551
      %v595 = vunpack.c.l.b16 %v552
      %v596 = vunpack.c.l.b16 %v553
      %v597 = vunpack.c.l.b16 %v554
      %v598 = vunpack.c.l.b16 %v555
      %v599 = vunpack.c.l.b16 %v556
      %v600 = vunpack.c.l.b16 %v557
      %v601 = vunpack.c.l.b16 %v558
      %v602 = vunpack.c.l.b16 %v559
      %v603 = vunpack.c.l.b16 %v560
      %v604 = vunpack.c.l.b16 %v561
      %v605 = vunpack.c.l.b16 %v562
      %v606 = vunpack.c.l.b16 %v567
      %v607 = vpack.c.b16 %v591, %v590
      %v608 = vpack.c.b16 %v593, %v592
      %v609 = vpack.c.b16 %v595, %v594
      %v610 = vpack.c.b16 %v597, %v596
      %v611 = vpack.c.b16 %v599, %v598
      %v612 = vpack.c.b16 %v601, %v600
      %v613 = vpack.c.b16 %v603, %v602
      %v614 = vpack.c.b16 %v605, %v604
      %v615 = vpack.c.b16 %v606, %v606
      %vm616 = vsmask.f32 7424
      %v618 = vshrl.u32 %v607, 16
      %v620 = vshll.u32 %v607, 16
      %v622 = vrot.slane %v620, 1
      %v623 = vor.u32 %v618, %v622
      %v625 = vshll.u32 %v608, 16
      %v627 = vrot.slane %v625, 1
      %v628 = vsel %vm616, %v623, %v627
      %v629 = vshrl.u32 %v608, 16
      %v631 = vor.u32 %v629, %v627
      %v633 = vshll.u32 %v609, 16
      %v635 = vrot.slane %v633, 1
      %v636 = vsel %vm616, %v631, %v635
      %v637 = vshrl.u32 %v609, 16
      %v639 = vor.u32 %v637, %v635
      %v641 = vshll.u32 %v610, 16
      %v643 = vrot.slane %v641, 1
      %v644 = vsel %vm616, %v639, %v643
      %v645 = vshrl.u32 %v610, 16
      %v647 = vor.u32 %v645, %v643
      %v649 = vshll.u32 %v611, 16
      %v651 = vrot.slane %v649, 1
      %v652 = vsel %vm616, %v647, %v651
      %v653 = vshrl.u32 %v611, 16
      %v655 = vor.u32 %v653, %v651
      %v657 = vshll.u32 %v612, 16
      %v659 = vrot.slane %v657, 1
      %v660 = vsel %vm616, %v655, %v659
      %v661 = vshrl.u32 %v612, 16
      %v663 = vor.u32 %v661, %v659
      %v665 = vshll.u32 %v613, 16
      %v667 = vrot.slane %v665, 1
      %v668 = vsel %vm616, %v663, %v667
      %v669 = vshrl.u32 %v613, 16
      %v671 = vor.u32 %v669, %v667
      %v673 = vshll.u32 %v614, 16
      %v675 = vrot.slane %v673, 1
      %v676 = vsel %vm616, %v671, %v675
      %v677 = vshrl.u32 %v614, 16
      %v679 = vor.u32 %v677, %v675
      %v681 = vshll.u32 %v615, 16
      %v683 = vrot.slane %v681, 1
      %v684 = vsel %vm616, %v679, %v683
      %v689 = vunpack.c.l.b16 %v569
      %v690 = vunpack.c.l.b16 %v570
      %v691 = vunpack.c.l.b16 %v571
      %v692 = vunpack.c.l.b16 %v572
      %v693 = vpack.c.b16 %v690, %v689
      %v694 = vpack.c.b16 %v692, %v691
      %vm697 = vcmask 261120
      %v699 = vsel %vm697, %v628, 0
      %v702 = vsel %vm697, %v636, 0
      %v705 = vsel %vm697, %v644, 0
      %v708 = vsel %vm697, %v652, 0
      %v711 = vsel %vm697, %v660, 0
      %v714 = vsel %vm697, %v668, 0
      %v717 = vsel %vm697, %v676, 0
      %v720 = vsel %vm697, %v684, 0
      %722 = vmatprep.subr.bf16.mxu0 0
      %723 = vmatpush1.bf16.msra.mxu0 %v693
      %724 = vmatprep.subr.bf16.mxu0 0
      %725 = vmatpush1.bf16.msra.mxu0 %v694
      %726 = vmatprep.subr.bf16.mxu0 0
      %727 = vmatpush1.bf16.msra.mxu0 0
      %728 = vmatprep.subr.bf16.mxu0 0
      %729 = vmatpush1.bf16.msra.mxu0 0
      %730 = vmatprep.subr.bf16.mxu0 0
      %731 = vmatpush1.bf16.msra.mxu0 0
      %732 = vmatprep.subr.bf16.mxu0 0
      %733 = vmatpush1.bf16.msra.mxu0 0
      %734 = vmatprep.subr.bf16.mxu0 0
      %735 = vmatpush1.bf16.msra.mxu0 0
      %736 = vmatprep.subr.bf16.mxu0 0
      %737 = vmatpush1.bf16.msra.mxu0 0
      %738 = vmatprep.subr.bf16.mxu0 0
      %739 = vmatpush1.bf16.msra.mxu0 0
      %740 = vmatprep.subr.bf16.mxu0 0
      %741 = vmatpush1.bf16.msra.mxu0 0
      %742 = vmatprep.subr.bf16.mxu0 0
      %743 = vmatpush1.bf16.msra.mxu0 0
      %744 = vmatprep.subr.bf16.mxu0 0
      %745 = vmatpush1.bf16.msra.mxu0 0
      %746 = vmatprep.subr.bf16.mxu0 0
      %747 = vmatpush1.bf16.msra.mxu0 0
      %748 = vmatprep.subr.bf16.mxu0 0
      %749 = vmatpush1.bf16.msra.mxu0 0
      %750 = vmatprep.subr.bf16.mxu0 0
      %751 = vmatpush1.bf16.msra.mxu0 0
      %752 = vmatprep.subr.bf16.mxu0 0
      %753 = vmatpush1.bf16.msra.mxu0 0
      %754 = vmatprep.mubr.bf16.mxu0 0
      %755 = vmatmul.mubr.bf16.gmra.mrb[0].mxu0 %v699
      %v756 = vpop.f32.mrb[0].mxu0
      %v757 = vadd.f32 0.0, %v756
      %v758 = vpop.f32.mrb[0].mxu0
      %v759 = vpop.f32.mrb[0].mxu0
      %v760 = vadd.f32 0.0, %v759
      %v761 = vpop.f32.mrb[0].mxu0
      %762 = vmatprep.mubr.bf16.mxu0 0
      %763 = vmatmul.mubr.bf16.gmra.mrb[0].mxu0 %v702
      %v764 = vpop.f32.mrb[0].mxu0
      %v765 = vadd.f32 0.0, %v764
      %v766 = vpop.f32.mrb[0].mxu0
      %v767 = vpop.f32.mrb[0].mxu0
      %v768 = vadd.f32 0.0, %v767
      %v769 = vpop.f32.mrb[0].mxu0
      %770 = vmatprep.mubr.bf16.mxu0 0
      %771 = vmatmul.mubr.bf16.gmra.mrb[0].mxu0 %v705
      %v772 = vpop.f32.mrb[0].mxu0
      %v773 = vadd.f32 0.0, %v772
      %v774 = vpop.f32.mrb[0].mxu0
      %v775 = vpop.f32.mrb[0].mxu0
      %v776 = vadd.f32 0.0, %v775
      %v777 = vpop.f32.mrb[0].mxu0
      %778 = vmatprep.mubr.bf16.mxu0 0
      %779 = vmatmul.mubr.bf16.gmra.mrb[0].mxu0 %v708
      %v780 = vpop.f32.mrb[0].mxu0
      %v781 = vadd.f32 0.0, %v780
      %v782 = vpop.f32.mrb[0].mxu0
      %v783 = vpop.f32.mrb[0].mxu0
      %v784 = vadd.f32 0.0, %v783
      %v785 = vpop.f32.mrb[0].mxu0
      %786 = vmatprep.mubr.bf16.mxu0 0
      %787 = vmatmul.mubr.bf16.gmra.mrb[0].mxu0 %v711
      %v788 = vpop.f32.mrb[0].mxu0
      %v789 = vadd.f32 0.0, %v788
      %v790 = vpop.f32.mrb[0].mxu0
      %v791 = vpop.f32.mrb[0].mxu0
      %v792 = vadd.f32 0.0, %v791
      %v793 = vpop.f32.mrb[0].mxu0
      %794 = vmatprep.mubr.bf16.mxu0 0
      %795 = vmatmul.mubr.bf16.gmra.mrb[0].mxu0 %v714
      %v796 = vpop.f32.mrb[0].mxu0
      %v797 = vadd.f32 0.0, %v796
      %v798 = vpop.f32.mrb[0].mxu0
      %v799 = vpop.f32.mrb[0].mxu0
      %v800 = vadd.f32 0.0, %v799
      %v801 = vpop.f32.mrb[0].mxu0
      %802 = vmatprep.mubr.bf16.mxu0 0
      %803 = vmatmul.mubr.bf16.gmra.mrb[0].mxu0 %v717
      %v804 = vpop.f32.mrb[0].mxu0
      %v805 = vadd.f32 0.0, %v804
      %v806 = vpop.f32.mrb[0].mxu0
      %v807 = vpop.f32.mrb[0].mxu0
      %v808 = vadd.f32 0.0, %v807
      %v809 = vpop.f32.mrb[0].mxu0
      %810 = vmatprep.mubr.bf16.mxu0 0
      %811 = vmatmul.mubr.bf16.gmra.mrb[0].mxu0 %v720
      %v812 = vpop.f32.mrb[0].mxu0
      %v813 = vadd.f32 0.0, %v812
      %v814 = vpop.f32.mrb[0].mxu0
      %v815 = vpop.f32.mrb[0].mxu0
      %v816 = vadd.f32 0.0, %v815
      %v817 = vpop.f32.mrb[0].mxu0
      %818 = vdwg.mxu0
      %v823 = vunpack.c.l.b16 %v563
      %v824 = vunpack.c.l.b16 %v564
      %v825 = vunpack.c.l.b16 %v565
      %v826 = vunpack.c.l.b16 %v566
      %v827 = vpack.c.b16 %v824, %v823
      %v828 = vpack.c.b16 %v826, %v825
      %v831 = vsel %vm697, %v607, 0
      %v833 = vsel %vm697, %v608, 0
      %v835 = vsel %vm697, %v609, 0
      %v837 = vsel %vm697, %v610, 0
      %v839 = vsel %vm697, %v611, 0
      %v841 = vsel %vm697, %v612, 0
      %v843 = vsel %vm697, %v613, 0
      %v845 = vsel %vm697, %v614, 0
      %847 = vmatprep.subr.bf16.mxu0 0
      %848 = vmatpush1.bf16.msra.mxu0 %v827
      %849 = vmatprep.subr.bf16.mxu0 0
      %850 = vmatpush1.bf16.msra.mxu0 %v828
      %851 = vmatprep.subr.bf16.mxu0 0
      %852 = vmatpush1.bf16.msra.mxu0 0
      %853 = vmatprep.subr.bf16.mxu0 0
      %854 = vmatpush1.bf16.msra.mxu0 0
      %855 = vmatprep.subr.bf16.mxu0 0
      %856 = vmatpush1.bf16.msra.mxu0 0
      %857 = vmatprep.subr.bf16.mxu0 0
      %858 = vmatpush1.bf16.msra.mxu0 0
      %859 = vmatprep.subr.bf16.mxu0 0
      %860 = vmatpush1.bf16.msra.mxu0 0
      %861 = vmatprep.subr.bf16.mxu0 0
      %862 = vmatpush1.bf16.msra.mxu0 0
      %863 = vmatprep.subr.bf16.mxu0 0
      %864 = vmatpush1.bf16.msra.mxu0 0
      %865 = vmatprep.subr.bf16.mxu0 0
      %866 = vmatpush1.bf16.msra.mxu0 0
      %867 = vmatprep.subr.bf16.mxu0 0
      %868 = vmatpush1.bf16.msra.mxu0 0
      %869 = vmatprep.subr.bf16.mxu0 0
      %870 = vmatpush1.bf16.msra.mxu0 0
      %871 = vmatprep.subr.bf16.mxu0 0
      %872 = vmatpush1.bf16.msra.mxu0 0
      %873 = vmatprep.subr.bf16.mxu0 0
      %874 = vmatpush1.bf16.msra.mxu0 0
      %875 = vmatprep.subr.bf16.mxu0 0
      %876 = vmatpush1.bf16.msra.mxu0 0
      %877 = vmatprep.subr.bf16.mxu0 0
      %878 = vmatpush1.bf16.msra.mxu0 0
      %879 = vmatprep.mubr.bf16.mxu0 0
      %880 = vmatmul.mubr.bf16.gmra.mrb[0].mxu0 %v831
      %v881 = vpop.f32.mrb[0].mxu0
      %v882 = vadd.f32 %v757, %v881
      %v883 = vpop.f32.mrb[0].mxu0
      %v884 = vpop.f32.mrb[0].mxu0
      %v885 = vadd.f32 %v760, %v884
      %v886 = vpop.f32.mrb[0].mxu0
      %887 = vmatprep.mubr.bf16.mxu0 0
      %888 = vmatmul.mubr.bf16.gmra.mrb[0].mxu0 %v833
      %v889 = vpop.f32.mrb[0].mxu0
      %v890 = vadd.f32 %v765, %v889
      %v891 = vpop.f32.mrb[0].mxu0
      %v892 = vpop.f32.mrb[0].mxu0
      %v893 = vadd.f32 %v768, %v892
      %v894 = vpop.f32.mrb[0].mxu0
      %895 = vmatprep.mubr.bf16.mxu0 0
      %896 = vmatmul.mubr.bf16.gmra.mrb[0].mxu0 %v835
      %v897 = vpop.f32.mrb[0].mxu0
      %v898 = vadd.f32 %v773, %v897
      %v899 = vpop.f32.mrb[0].mxu0
      %v900 = vpop.f32.mrb[0].mxu0
      %v901 = vadd.f32 %v776, %v900
      %v902 = vpop.f32.mrb[0].mxu0
      %903 = vmatprep.mubr.bf16.mxu0 0
      %904 = vmatmul.mubr.bf16.gmra.mrb[0].mxu0 %v837
      %v905 = vpop.f32.mrb[0].mxu0
      %v906 = vadd.f32 %v781, %v905
      %v907 = vpop.f32.mrb[0].mxu0
      %v908 = vpop.f32.mrb[0].mxu0
      %v909 = vadd.f32 %v784, %v908
      %v910 = vpop.f32.mrb[0].mxu0
      %911 = vmatprep.mubr.bf16.mxu0 0
      %912 = vmatmul.mubr.bf16.gmra.mrb[0].mxu0 %v839
      %v913 = vpop.f32.mrb[0].mxu0
      %v914 = vadd.f32 %v789, %v913
      %v915 = vpop.f32.mrb[0].mxu0
      %v916 = vpop.f32.mrb[0].mxu0
      %v917 = vadd.f32 %v792, %v916
      %v918 = vpop.f32.mrb[0].mxu0
      %919 = vmatprep.mubr.bf16.mxu0 0
      %920 = vmatmul.mubr.bf16.gmra.mrb[0].mxu0 %v841
      %v921 = vpop.f32.mrb[0].mxu0
      %v922 = vadd.f32 %v797, %v921
      %v923 = vpop.f32.mrb[0].mxu0
      %v924 = vpop.f32.mrb[0].mxu0
      %v925 = vadd.f32 %v800, %v924
      %v926 = vpop.f32.mrb[0].mxu0
      %927 = vmatprep.mubr.bf16.mxu0 0
      %928 = vmatmul.mubr.bf16.gmra.mrb[0].mxu0 %v843
      %v929 = vpop.f32.mrb[0].mxu0
      %v930 = vadd.f32 %v805, %v929
      %v931 = vpop.f32.mrb[0].mxu0
      %v932 = vpop.f32.mrb[0].mxu0
      %v933 = vadd.f32 %v808, %v932
      %v934 = vpop.f32.mrb[0].mxu0
      %935 = vmatprep.mubr.bf16.mxu0 0
      %936 = vmatmul.mubr.bf16.gmra.mrb[0].mxu0 %v845
      %v937 = vpop.f32.mrb[0].mxu0
      %v938 = vadd.f32 %v813, %v937
      %v939 = vpop.f32.mrb[0].mxu0
      %v940 = vpop.f32.mrb[0].mxu0
      %v941 = vadd.f32 %v816, %v940
      %v942 = vpop.f32.mrb[0].mxu0
      %943 = vdwg.mxu0
      %v944 = vld [vmem:[#allocation2] sm:$0xe]
      %s945 = scalar_lea.vmem %s1, 32
      %v946 = vld [vmem:[%s945] sm:$0xf]
      %v947 = vld [vmem:[%s945 + $0x4] sm:$0xf]
      %v948 = vld [vmem:[%s945 + $0x8] sm:$0xf]
      %v949 = vld [vmem:[%s945 + $0xc] sm:$0xf]
      %v951 = vunpack.c.l.b16 %v944
      %v952 = vpack.c.b16 %v591, %v951
      %vm953 = vcmask 1046528
      %v954 = vrot.slane %v952, 1
      %v955 = vrot.slane %v608, 1
      %v956 = vsel %vm953, %v954, %v955
      %v957 = vrot.slane %v609, 1
      %v958 = vsel %vm953, %v955, %v957
      %v959 = vrot.slane %v610, 1
      %v960 = vsel %vm953, %v957, %v959
      %v961 = vrot.slane %v611, 1
      %v962 = vsel %vm953, %v959, %v961
      %v963 = vrot.slane %v612, 1
      %v964 = vsel %vm953, %v961, %v963
      %v965 = vrot.slane %v613, 1
      %v966 = vsel %vm953, %v963, %v965
      %v967 = vrot.slane %v614, 1
      %v968 = vsel %vm953, %v965, %v967
      %v969 = vrot.slane %v615, 1
      %v970 = vsel %vm953, %v967, %v969
      %v975 = vunpack.c.l.b16 %v946
      %v976 = vunpack.c.l.b16 %v947
      %v977 = vunpack.c.l.b16 %v948
      %v978 = vunpack.c.l.b16 %v949
      %v979 = vpack.c.b16 %v976, %v975
      %v980 = vpack.c.b16 %v978, %v977
      %v984 = vsel %vm697, %v956, 0
      %v987 = vsel %vm697, %v958, 0
      %v990 = vsel %vm697, %v960, 0
      %v993 = vsel %vm697, %v962, 0
      %v996 = vsel %vm697, %v964, 0
      %v999 = vsel %vm697, %v966, 0
      %v1002 = vsel %vm697, %v968, 0
      %v1005 = vsel %vm697, %v970, 0
      %1007 = vmatprep.subr.bf16.mxu0 0
      %1008 = vmatpush1.bf16.msra.mxu0 %v979
      %1009 = vmatprep.subr.bf16.mxu0 0
      %1010 = vmatpush1.bf16.msra.mxu0 %v980
      %1011 = vmatprep.subr.bf16.mxu0 0
      %1012 = vmatpush1.bf16.msra.mxu0 0
      %1013 = vmatprep.subr.bf16.mxu0 0
      %1014 = vmatpush1.bf16.msra.mxu0 0
      %1015 = vmatprep.subr.bf16.mxu0 0
      %1016 = vmatpush1.bf16.msra.mxu0 0
      %1017 = vmatprep.subr.bf16.mxu0 0
      %1018 = vmatpush1.bf16.msra.mxu0 0
      %1019 = vmatprep.subr.bf16.mxu0 0
      %1020 = vmatpush1.bf16.msra.mxu0 0
      %1021 = vmatprep.subr.bf16.mxu0 0
      %1022 = vmatpush1.bf16.msra.mxu0 0
      %1023 = vmatprep.subr.bf16.mxu0 0
      %1024 = vmatpush1.bf16.msra.mxu0 0
      %1025 = vmatprep.subr.bf16.mxu0 0
      %1026 = vmatpush1.bf16.msra.mxu0 0
      %1027 = vmatprep.subr.bf16.mxu0 0
      %1028 = vmatpush1.bf16.msra.mxu0 0
      %1029 = vmatprep.subr.bf16.mxu0 0
      %1030 = vmatpush1.bf16.msra.mxu0 0
      %1031 = vmatprep.subr.bf16.mxu0 0
      %1032 = vmatpush1.bf16.msra.mxu0 0
      %1033 = vmatprep.subr.bf16.mxu0 0
      %1034 = vmatpush1.bf16.msra.mxu0 0
      %1035 = vmatprep.subr.bf16.mxu0 0
      %1036 = vmatpush1.bf16.msra.mxu0 0
      %1037 = vmatprep.subr.bf16.mxu0 0
      %1038 = vmatpush1.bf16.msra.mxu0 0
      %1039 = vmatprep.mubr.bf16.mxu0 0
      %1040 = vmatmul.mubr.bf16.gmra.mrb[0].mxu0 %v984
      %v1041 = vpop.f32.mrb[0].mxu0
      %v1042 = vadd.f32 0.0, %v1041
      %v1043 = vpop.f32.mrb[0].mxu0
      %v1044 = vpop.f32.mrb[0].mxu0
      %v1045 = vadd.f32 0.0, %v1044
      %v1046 = vpop.f32.mrb[0].mxu0
      %1047 = vmatprep.mubr.bf16.mxu0 0
      %1048 = vmatmul.mubr.bf16.gmra.mrb[0].mxu0 %v987
      %v1049 = vpop.f32.mrb[0].mxu0
      %v1050 = vadd.f32 0.0, %v1049
      %v1051 = vpop.f32.mrb[0].mxu0
      %v1052 = vpop.f32.mrb[0].mxu0
      %v1053 = vadd.f32 0.0, %v1052
      %v1054 = vpop.f32.mrb[0].mxu0
      %1055 = vmatprep.mubr.bf16.mxu0 0
      %1056 = vmatmul.mubr.bf16.gmra.mrb[0].mxu0 %v990
      %v1057 = vpop.f32.mrb[0].mxu0
      %v1058 = vadd.f32 0.0, %v1057
      %v1059 = vpop.f32.mrb[0].mxu0
      %v1060 = vpop.f32.mrb[0].mxu0
      %v1061 = vadd.f32 0.0, %v1060
      %v1062 = vpop.f32.mrb[0].mxu0
      %1063 = vmatprep.mubr.bf16.mxu0 0
      %1064 = vmatmul.mubr.bf16.gmra.mrb[0].mxu0 %v993
      %v1065 = vpop.f32.mrb[0].mxu0
      %v1066 = vadd.f32 0.0, %v1065
      %v1067 = vpop.f32.mrb[0].mxu0
      %v1068 = vpop.f32.mrb[0].mxu0
      %v1069 = vadd.f32 0.0, %v1068
      %v1070 = vpop.f32.mrb[0].mxu0
      %1071 = vmatprep.mubr.bf16.mxu0 0
      %1072 = vmatmul.mubr.bf16.gmra.mrb[0].mxu0 %v996
      %v1073 = vpop.f32.mrb[0].mxu0
      %v1074 = vadd.f32 0.0, %v1073
      %v1075 = vpop.f32.mrb[0].mxu0
      %v1076 = vpop.f32.mrb[0].mxu0
      %v1077 = vadd.f32 0.0, %v1076
      %v1078 = vpop.f32.mrb[0].mxu0
      %1079 = vmatprep.mubr.bf16.mxu0 0
      %1080 = vmatmul.mubr.bf16.gmra.mrb[0].mxu0 %v999
      %v1081 = vpop.f32.mrb[0].mxu0
      %v1082 = vadd.f32 0.0, %v1081
      %v1083 = vpop.f32.mrb[0].mxu0
      %v1084 = vpop.f32.mrb[0].mxu0
      %v1085 = vadd.f32 0.0, %v1084
      %v1086 = vpop.f32.mrb[0].mxu0
      %1087 = vmatprep.mubr.bf16.mxu0 0
      %1088 = vmatmul.mubr.bf16.gmra.mrb[0].mxu0 %v1002
      %v1089 = vpop.f32.mrb[0].mxu0
      %v1090 = vadd.f32 0.0, %v1089
      %v1091 = vpop.f32.mrb[0].mxu0
      %v1092 = vpop.f32.mrb[0].mxu0
      %v1093 = vadd.f32 0.0, %v1092
      %v1094 = vpop.f32.mrb[0].mxu0
      %1095 = vmatprep.mubr.bf16.mxu0 0
      %1096 = vmatmul.mubr.bf16.gmra.mrb[0].mxu0 %v1005
      %v1097 = vpop.f32.mrb[0].mxu0
      %v1098 = vadd.f32 0.0, %v1097
      %v1099 = vpop.f32.mrb[0].mxu0
      %v1100 = vpop.f32.mrb[0].mxu0
      %v1101 = vadd.f32 0.0, %v1100
      %v1102 = vpop.f32.mrb[0].mxu0
      %1103 = vdwg.mxu0
      %v1104 = vadd.f32 %v882, %v1042
      %v1105 = vadd.f32 %v885, %v1045
      %v1106 = vadd.f32 %v890, %v1050
      %v1107 = vadd.f32 %v893, %v1053
      %v1108 = vadd.f32 %v898, %v1058
      %v1109 = vadd.f32 %v901, %v1061
      %v1110 = vadd.f32 %v906, %v1066
      %v1111 = vadd.f32 %v909, %v1069
      %v1112 = vadd.f32 %v914, %v1074
      %v1113 = vadd.f32 %v917, %v1077
      %v1114 = vadd.f32 %v922, %v1082
      %v1115 = vadd.f32 %v925, %v1085
      %v1116 = vadd.f32 %v930, %v1090
      %v1117 = vadd.f32 %v933, %v1093
      %v1118 = vadd.f32 %v938, %v1098
      %v1119 = vadd.f32 %v941, %v1101
      %v1120 = vld [vmem:[%s2] sm:$0x1]
      %v1122 = vlaneseq
      %v1123 = vshrl.u32 %v1122, 7
      %v1124 = vsub.s32 0, %v1123
      %v1125 = vrot.slane %v1120, %v1124
      %v1127 = vadd.f32 %v1104, %v1125
      %v1128 = vadd.f32 %v1105, %v1125
      %v1129 = vadd.f32 %v1106, %v1125
      %v1130 = vadd.f32 %v1107, %v1125
      %v1131 = vadd.f32 %v1108, %v1125
      %v1132 = vadd.f32 %v1109, %v1125
      %v1133 = vadd.f32 %v1110, %v1125
      %v1134 = vadd.f32 %v1111, %v1125
      %v1135 = vadd.f32 %v1112, %v1125
      %v1136 = vadd.f32 %v1113, %v1125
      %v1137 = vadd.f32 %v1114, %v1125
      %v1138 = vadd.f32 %v1115, %v1125
      %v1139 = vadd.f32 %v1116, %v1125
      %v1140 = vadd.f32 %v1117, %v1125
      %v1141 = vadd.f32 %v1118, %v1125
      %v1142 = vadd.f32 %v1119, %v1125
      %v1143 = vmax.f32 %v1127, 0.0
      %v1144 = vmax.f32 %v1128, 0.0
      %v1145 = vmax.f32 %v1129, 0.0
      %v1146 = vmax.f32 %v1130, 0.0
      %v1147 = vmax.f32 %v1131, 0.0
      %v1148 = vmax.f32 %v1132, 0.0
      %v1149 = vmax.f32 %v1133, 0.0
      %v1150 = vmax.f32 %v1134, 0.0
      %v1151 = vmax.f32 %v1135, 0.0
      %v1152 = vmax.f32 %v1136, 0.0
      %v1153 = vmax.f32 %v1137, 0.0
      %v1154 = vmax.f32 %v1138, 0.0
      %v1155 = vmax.f32 %v1139, 0.0
      %v1156 = vmax.f32 %v1140, 0.0
      %v1157 = vmax.f32 %v1141, 0.0
      %v1158 = vmax.f32 %v1142, 0.0
      %v1159 = vpack.c.bf16 %v1144, %v1143
      %v1160 = vpack.c.bf16 %v1146, %v1145
      %v1161 = vpack.c.bf16 %v1148, %v1147
      %v1162 = vpack.c.bf16 %v1150, %v1149
      %v1163 = vpack.c.bf16 %v1152, %v1151
      %v1164 = vpack.c.bf16 %v1154, %v1153
      %v1165 = vpack.c.bf16 %v1156, %v1155
      %v1166 = vpack.c.bf16 %v1158, %v1157
      %v1175 = vunpack.c.l.b16 %v1159
      %v1176 = vunpack.c.h.b16 %v1159
      %v1177 = vunpack.c.l.b16 %v1160
      %v1178 = vunpack.c.h.b16 %v1160
      %v1179 = vunpack.c.l.b16 %v1161
      %v1180 = vunpack.c.h.b16 %v1161
      %v1181 = vunpack.c.l.b16 %v1162
      %v1182 = vunpack.c.h.b16 %v1162
      %v1183 = vunpack.c.l.b16 %v1163
      %v1184 = vunpack.c.h.b16 %v1163
      %v1185 = vunpack.c.l.b16 %v1164
      %v1186 = vunpack.c.h.b16 %v1164
      %v1187 = vunpack.c.l.b16 %v1165
      %v1188 = vunpack.c.h.b16 %v1165
      %v1189 = vunpack.c.l.b16 %v1166
      %v1190 = vunpack.c.h.b16 %v1166
      %v1191 = vpack.c.b16 %v1175, %v1175
      %v1192 = vpack.c.b16 %v1176, %v1176
      %v1193 = vpack.c.b16 %v1177, %v1177
      %v1194 = vpack.c.b16 %v1178, %v1178
      %v1195 = vpack.c.b16 %v1179, %v1179
      %v1196 = vpack.c.b16 %v1180, %v1180
      %v1197 = vpack.c.b16 %v1181, %v1181
      %v1198 = vpack.c.b16 %v1182, %v1182
      %v1199 = vpack.c.b16 %v1183, %v1183
      %v1200 = vpack.c.b16 %v1184, %v1184
      %v1201 = vpack.c.b16 %v1185, %v1185
      %v1202 = vpack.c.b16 %v1186, %v1186
      %v1203 = vpack.c.b16 %v1187, %v1187
      %v1204 = vpack.c.b16 %v1188, %v1188
      %v1205 = vpack.c.b16 %v1189, %v1189
      %v1206 = vpack.c.b16 %v1190, %v1190
      %v1208 = vshrl.u32 %v1191, 16
      %v1210 = vrot.slane %v1208, 7
      %v1211 = vshll.u32 %v1191, 16
      %v1213 = vor.u32 %v1210, %v1211
      %v1214 = vrot.slane %v1210, 4
      %v1216 = vshrl.u32 %v1192, 16
      %v1218 = vrot.slane %v1216, 7
      %v1219 = vshll.u32 %v1192, 16
      %v1221 = vor.u32 %v1218, %v1219
      %v1222 = vsel %vm362, %v1214, %v1221
      %v1223 = vrot.slane %v1218, 4
      %v1225 = vshrl.u32 %v1193, 16
      %v1227 = vrot.slane %v1225, 7
      %v1228 = vshll.u32 %v1193, 16
      %v1230 = vor.u32 %v1227, %v1228
      %v1231 = vsel %vm362, %v1223, %v1230
      %v1232 = vrot.slane %v1227, 4
      %v1234 = vshrl.u32 %v1194, 16
      %v1236 = vrot.slane %v1234, 7
      %v1237 = vshll.u32 %v1194, 16
      %v1239 = vor.u32 %v1236, %v1237
      %v1240 = vsel %vm362, %v1232, %v1239
      %v1241 = vrot.slane %v1236, 4
      %v1243 = vshrl.u32 %v1195, 16
      %v1245 = vrot.slane %v1243, 7
      %v1246 = vshll.u32 %v1195, 16
      %v1248 = vor.u32 %v1245, %v1246
      %v1249 = vsel %vm362, %v1241, %v1248
      %v1250 = vrot.slane %v1245, 4
      %v1252 = vshrl.u32 %v1196, 16
      %v1254 = vrot.slane %v1252, 7
      %v1255 = vshll.u32 %v1196, 16
      %v1257 = vor.u32 %v1254, %v1255
      %v1258 = vsel %vm362, %v1250, %v1257
      %v1259 = vrot.slane %v1254, 4
      %v1261 = vshrl.u32 %v1197, 16
      %v1263 = vrot.slane %v1261, 7
      %v1264 = vshll.u32 %v1197, 16
      %v1266 = vor.u32 %v1263, %v1264
      %v1267 = vsel %vm362, %v1259, %v1266
      %v1268 = vrot.slane %v1263, 4
      %v1270 = vshrl.u32 %v1198, 16
      %v1272 = vrot.slane %v1270, 7
      %v1273 = vshll.u32 %v1198, 16
      %v1275 = vor.u32 %v1272, %v1273
      %v1276 = vsel %vm362, %v1268, %v1275
      %v1277 = vrot.slane %v1272, 4
      %v1279 = vshrl.u32 %v1199, 16
      %v1281 = vrot.slane %v1279, 7
      %v1282 = vshll.u32 %v1199, 16
      %v1284 = vor.u32 %v1281, %v1282
      %v1285 = vsel %vm362, %v1277, %v1284
      %v1286 = vrot.slane %v1281, 4
      %v1288 = vshrl.u32 %v1200, 16
      %v1290 = vrot.slane %v1288, 7
      %v1291 = vshll.u32 %v1200, 16
      %v1293 = vor.u32 %v1290, %v1291
      %v1294 = vsel %vm362, %v1286, %v1293
      %v1295 = vrot.slane %v1290, 4
      %v1297 = vshrl.u32 %v1201, 16
      %v1299 = vrot.slane %v1297, 7
      %v1300 = vshll.u32 %v1201, 16
      %v1302 = vor.u32 %v1299, %v1300
      %v1303 = vsel %vm362, %v1295, %v1302
      %v1304 = vrot.slane %v1299, 4
      %v1306 = vshrl.u32 %v1202, 16
      %v1308 = vrot.slane %v1306, 7
      %v1309 = vshll.u32 %v1202, 16
      %v1311 = vor.u32 %v1308, %v1309
      %v1312 = vsel %vm362, %v1304, %v1311
      %v1313 = vrot.slane %v1308, 4
      %v1315 = vshrl.u32 %v1203, 16
      %v1317 = vrot.slane %v1315, 7
      %v1318 = vshll.u32 %v1203, 16
      %v1320 = vor.u32 %v1317, %v1318
      %v1321 = vsel %vm362, %v1313, %v1320
      %v1322 = vrot.slane %v1317, 4
      %v1324 = vshrl.u32 %v1204, 16
      %v1326 = vrot.slane %v1324, 7
      %v1327 = vshll.u32 %v1204, 16
      %v1329 = vor.u32 %v1326, %v1327
      %v1330 = vsel %vm362, %v1322, %v1329
      %v1331 = vrot.slane %v1326, 4
      %v1333 = vshrl.u32 %v1205, 16
      %v1335 = vrot.slane %v1333, 7
      %v1336 = vshll.u32 %v1205, 16
      %v1338 = vor.u32 %v1335, %v1336
      %v1339 = vsel %vm362, %v1331, %v1338
      %v1340 = vrot.slane %v1335, 4
      %v1342 = vshrl.u32 %v1206, 16
      %v1344 = vrot.slane %v1342, 7
      %v1345 = vshll.u32 %v1206, 16
      %v1347 = vor.u32 %v1344, %v1345
      %v1348 = vsel %vm362, %v1340, %v1347
      %v1349 = vrot.slane %v1344, 4
      %v1367 = vld [vmem:[#allocation3] sm:$0xf]
      %v1368 = vsel %vm524, %v1213, %v1367
      %1369 = vst [vmem:[#allocation3] sm:$0xf] %v1368
      %1370 = vst.msk [vmem:[#allocation3 + $0x4] sm:$0xf] %vm528, %v1222
      %1371 = vst.msk [vmem:[#allocation3 + $0x8] sm:$0xf] %vm528, %v1231
      %1372 = vst.msk [vmem:[#allocation3 + $0xc] sm:$0xf] %vm528, %v1240
      %1373 = vst.msk [vmem:[#allocation3 + $0x10] sm:$0xf] %vm528, %v1249
      %1374 = vst.msk [vmem:[#allocation3 + $0x14] sm:$0xf] %vm528, %v1258
      %1375 = vst.msk [vmem:[#allocation3 + $0x18] sm:$0xf] %vm528, %v1267
      %1376 = vst.msk [vmem:[#allocation3 + $0x1c] sm:$0xf] %vm528, %v1276
      %1377 = vst.msk [vmem:[#allocation3 + $0x20] sm:$0xf] %vm528, %v1285
      %1378 = vst.msk [vmem:[#allocation3 + $0x24] sm:$0xf] %vm528, %v1294
      %1379 = vst.msk [vmem:[#allocation3 + $0x28] sm:$0xf] %vm528, %v1303
      %1380 = vst.msk [vmem:[#allocation3 + $0x2c] sm:$0xf] %vm528, %v1312
      %1381 = vst.msk [vmem:[#allocation3 + $0x30] sm:$0xf] %vm528, %v1321
      %1382 = vst.msk [vmem:[#allocation3 + $0x34] sm:$0xf] %vm528, %v1330
      %1383 = vst.msk [vmem:[#allocation3 + $0x38] sm:$0xf] %vm528, %v1339
      %1384 = vst.msk [vmem:[#allocation3 + $0x3c] sm:$0xf] %vm528, %v1348
      %v1385 = vld [vmem:[#allocation3 + $0x40] sm:$0x1]
      %v1386 = vsel %vm282, %v1349, %v1385
      %1387 = vst [vmem:[#allocation3 + $0x40] sm:$0x1] %v1386
      %v1388 = vld [vmem:[#allocation3] sm:$0xf]
      %v1389 = vld [vmem:[#allocation3 + $0x4] sm:$0xf]
      %v1390 = vld [vmem:[#allocation3 + $0x8] sm:$0xf]
      %v1391 = vld [vmem:[#allocation3 + $0xc] sm:$0xf]
      %v1392 = vld [vmem:[#allocation3 + $0x10] sm:$0xf]
      %v1393 = vld [vmem:[#allocation3 + $0x14] sm:$0xf]
      %v1394 = vld [vmem:[#allocation3 + $0x18] sm:$0xf]
      %v1395 = vld [vmem:[#allocation3 + $0x1c] sm:$0xf]
      %v1396 = vld [vmem:[#allocation3 + $0x20] sm:$0xf]
      %v1397 = vld [vmem:[#allocation3 + $0x24] sm:$0xf]
      %v1398 = vld [vmem:[#allocation3 + $0x28] sm:$0xf]
      %v1399 = vld [vmem:[#allocation3 + $0x2c] sm:$0xf]
      %v1400 = vld [vmem:[#allocation3 + $0x30] sm:$0xf]
      %v1401 = vld [vmem:[#allocation3 + $0x34] sm:$0xf]
      %v1402 = vld [vmem:[#allocation3 + $0x38] sm:$0xf]
      %v1403 = vld [vmem:[#allocation3 + $0x3c] sm:$0xf]
      %v1404 = vld [vmem:[%s3] sm:$0xf]
      %v1405 = vld [vmem:[%s3 + $0x4] sm:$0xf]
      %v1406 = vld [vmem:[%s3 + $0x8] sm:$0xf]
      %v1407 = vld [vmem:[%s3 + $0xc] sm:$0xf]
      %v1408 = vld [vmem:[#allocation3 + $0x40] sm:$0x1]
      %s1409 = scalar_lea.vmem %s3, 16
      %v1410 = vld [vmem:[%s1409] sm:$0xf]
      %v1411 = vld [vmem:[%s1409 + $0x4] sm:$0xf]
      %v1412 = vld [vmem:[%s1409 + $0x8] sm:$0xf]
      %v1413 = vld [vmem:[%s1409 + $0xc] sm:$0xf]
      %v1431 = vunpack.c.l.b16 %v1388
      %v1432 = vunpack.c.l.b16 %v1389
      %v1433 = vunpack.c.l.b16 %v1390
      %v1434 = vunpack.c.l.b16 %v1391
      %v1435 = vunpack.c.l.b16 %v1392
      %v1436 = vunpack.c.l.b16 %v1393
      %v1437 = vunpack.c.l.b16 %v1394
      %v1438 = vunpack.c.l.b16 %v1395
      %v1439 = vunpack.c.l.b16 %v1396
      %v1440 = vunpack.c.l.b16 %v1397
      %v1441 = vunpack.c.l.b16 %v1398
      %v1442 = vunpack.c.l.b16 %v1399
      %v1443 = vunpack.c.l.b16 %v1400
      %v1444 = vunpack.c.l.b16 %v1401
      %v1445 = vunpack.c.l.b16 %v1402
      %v1446 = vunpack.c.l.b16 %v1403
      %v1447 = vunpack.c.l.b16 %v1408
      %v1448 = vpack.c.b16 %v1432, %v1431
      %v1449 = vpack.c.b16 %v1434, %v1433
      %v1450 = vpack.c.b16 %v1436, %v1435
      %v1451 = vpack.c.b16 %v1438, %v1437
      %v1452 = vpack.c.b16 %v1440, %v1439
      %v1453 = vpack.c.b16 %v1442, %v1441
      %v1454 = vpack.c.b16 %v1444, %v1443
      %v1455 = vpack.c.b16 %v1446, %v1445
      %v1456 = vpack.c.b16 %v1447, %v1447
      %v1458 = vshrl.u32 %v1448, 16
      %v1460 = vshll.u32 %v1448, 16
      %v1462 = vrot.slane %v1460, 1
      %v1463 = vor.u32 %v1458, %v1462
      %v1465 = vshll.u32 %v1449, 16
      %v1467 = vrot.slane %v1465, 1
      %v1468 = vsel %vm616, %v1463, %v1467
      %v1469 = vshrl.u32 %v1449, 16
      %v1471 = vor.u32 %v1469, %v1467
      %v1473 = vshll.u32 %v1450, 16
      %v1475 = vrot.slane %v1473, 1
      %v1476 = vsel %vm616, %v1471, %v1475
      %v1477 = vshrl.u32 %v1450, 16
      %v1479 = vor.u32 %v1477, %v1475
      %v1481 = vshll.u32 %v1451, 16
      %v1483 = vrot.slane %v1481, 1
      %v1484 = vsel %vm616, %v1479, %v1483
      %v1485 = vshrl.u32 %v1451, 16
      %v1487 = vor.u32 %v1485, %v1483
      %v1489 = vshll.u32 %v1452, 16
      %v1491 = vrot.slane %v1489, 1
      %v1492 = vsel %vm616, %v1487, %v1491
      %v1493 = vshrl.u32 %v1452, 16
      %v1495 = vor.u32 %v1493, %v1491
      %v1497 = vshll.u32 %v1453, 16
      %v1499 = vrot.slane %v1497, 1
      %v1500 = vsel %vm616, %v1495, %v1499
      %v1501 = vshrl.u32 %v1453, 16
      %v1503 = vor.u32 %v1501, %v1499
      %v1505 = vshll.u32 %v1454, 16
      %v1507 = vrot.slane %v1505, 1
      %v1508 = vsel %vm616, %v1503, %v1507
      %v1509 = vshrl.u32 %v1454, 16
      %v1511 = vor.u32 %v1509, %v1507
      %v1513 = vshll.u32 %v1455, 16
      %v1515 = vrot.slane %v1513, 1
      %v1516 = vsel %vm616, %v1511, %v1515
      %v1517 = vshrl.u32 %v1455, 16
      %v1519 = vor.u32 %v1517, %v1515
      %v1521 = vshll.u32 %v1456, 16
      %v1523 = vrot.slane %v1521, 1
      %v1524 = vsel %vm616, %v1519, %v1523
      %v1529 = vunpack.c.l.b16 %v1410
      %v1530 = vunpack.c.l.b16 %v1411
      %v1531 = vunpack.c.l.b16 %v1412
      %v1532 = vunpack.c.l.b16 %v1413
      %v1533 = vpack.c.b16 %v1530, %v1529
      %v1534 = vpack.c.b16 %v1532, %v1531
      %v1538 = vsel %vm697, %v1468, 0
      %v1541 = vsel %vm697, %v1476, 0
      %v1544 = vsel %vm697, %v1484, 0
      %v1547 = vsel %vm697, %v1492, 0
      %v1550 = vsel %vm697, %v1500, 0
      %v1553 = vsel %vm697, %v1508, 0
      %v1556 = vsel %vm697, %v1516, 0
      %v1559 = vsel %vm697, %v1524, 0
      %1561 = vmatprep.subr.bf16.mxu0 0
      %1562 = vmatpush1.bf16.msra.mxu0 %v1533
      %1563 = vmatprep.subr.bf16.mxu0 0
      %1564 = vmatpush1.bf16.msra.mxu0 %v1534
      %1565 = vmatprep.subr.bf16.mxu0 0
      %1566 = vmatpush1.bf16.msra.mxu0 0
      %1567 = vmatprep.subr.bf16.mxu0 0
      %1568 = vmatpush1.bf16.msra.mxu0 0
      %1569 = vmatprep.subr.bf16.mxu0 0
      %1570 = vmatpush1.bf16.msra.mxu0 0
      %1571 = vmatprep.subr.bf16.mxu0 0
      %1572 = vmatpush1.bf16.msra.mxu0 0
      %1573 = vmatprep.subr.bf16.mxu0 0
      %1574 = vmatpush1.bf16.msra.mxu0 0
      %1575 = vmatprep.subr.bf16.mxu0 0
      %1576 = vmatpush1.bf16.msra.mxu0 0
      %1577 = vmatprep.subr.bf16.mxu0 0
      %1578 = vmatpush1.bf16.msra.mxu0 0
      %1579 = vmatprep.subr.bf16.mxu0 0
      %1580 = vmatpush1.bf16.msra.mxu0 0
      %1581 = vmatprep.subr.bf16.mxu0 0
      %1582 = vmatpush1.bf16.msra.mxu0 0
      %1583 = vmatprep.subr.bf16.mxu0 0
      %1584 = vmatpush1.bf16.msra.mxu0 0
      %1585 = vmatprep.subr.bf16.mxu0 0
      %1586 = vmatpush1.bf16.msra.mxu0 0
      %1587 = vmatprep.subr.bf16.mxu0 0
      %1588 = vmatpush1.bf16.msra.mxu0 0
      %1589 = vmatprep.subr.bf16.mxu0 0
      %1590 = vmatpush1.bf16.msra.mxu0 0
      %1591 = vmatprep.subr.bf16.mxu0 0
      %1592 = vmatpush1.bf16.msra.mxu0 0
      %1593 = vmatprep.mubr.bf16.mxu0 0
      %1594 = vmatmul.mubr.bf16.gmra.mrb[0].mxu0 %v1538
      %v1595 = vpop.f32.mrb[0].mxu0
      %v1596 = vadd.f32 0.0, %v1595
      %v1597 = vpop.f32.mrb[0].mxu0
      %v1598 = vpop.f32.mrb[0].mxu0
      %v1599 = vadd.f32 0.0, %v1598
      %v1600 = vpop.f32.mrb[0].mxu0
      %1601 = vmatprep.mubr.bf16.mxu0 0
      %1602 = vmatmul.mubr.bf16.gmra.mrb[0].mxu0 %v1541
      %v1603 = vpop.f32.mrb[0].mxu0
      %v1604 = vadd.f32 0.0, %v1603
      %v1605 = vpop.f32.mrb[0].mxu0
      %v1606 = vpop.f32.mrb[0].mxu0
      %v1607 = vadd.f32 0.0, %v1606
      %v1608 = vpop.f32.mrb[0].mxu0
      %1609 = vmatprep.mubr.bf16.mxu0 0
      %1610 = vmatmul.mubr.bf16.gmra.mrb[0].mxu0 %v1544
      %v1611 = vpop.f32.mrb[0].mxu0
      %v1612 = vadd.f32 0.0, %v1611
      %v1613 = vpop.f32.mrb[0].mxu0
      %v1614 = vpop.f32.mrb[0].mxu0
      %v1615 = vadd.f32 0.0, %v1614
      %v1616 = vpop.f32.mrb[0].mxu0
      %1617 = vmatprep.mubr.bf16.mxu0 0
      %1618 = vmatmul.mubr.bf16.gmra.mrb[0].mxu0 %v1547
      %v1619 = vpop.f32.mrb[0].mxu0
      %v1620 = vadd.f32 0.0, %v1619
      %v1621 = vpop.f32.mrb[0].mxu0
      %v1622 = vpop.f32.mrb[0].mxu0
      %v1623 = vadd.f32 0.0, %v1622
      %v1624 = vpop.f32.mrb[0].mxu0
      %1625 = vmatprep.mubr.bf16.mxu0 0
      %1626 = vmatmul.mubr.bf16.gmra.mrb[0].mxu0 %v1550
      %v1627 = vpop.f32.mrb[0].mxu0
      %v1628 = vadd.f32 0.0, %v1627
      %v1629 = vpop.f32.mrb[0].mxu0
      %v1630 = vpop.f32.mrb[0].mxu0
      %v1631 = vadd.f32 0.0, %v1630
      %v1632 = vpop.f32.mrb[0].mxu0
      %1633 = vmatprep.mubr.bf16.mxu0 0
      %1634 = vmatmul.mubr.bf16.gmra.mrb[0].mxu0 %v1553
      %v1635 = vpop.f32.mrb[0].mxu0
      %v1636 = vadd.f32 0.0, %v1635
      %v1637 = vpop.f32.mrb[0].mxu0
      %v1638 = vpop.f32.mrb[0].mxu0
      %v1639 = vadd.f32 0.0, %v1638
      %v1640 = vpop.f32.mrb[0].mxu0
      %1641 = vmatprep.mubr.bf16.mxu0 0
      %1642 = vmatmul.mubr.bf16.gmra.mrb[0].mxu0 %v1556
      %v1643 = vpop.f32.mrb[0].mxu0
      %v1644 = vadd.f32 0.0, %v1643
      %v1645 = vpop.f32.mrb[0].mxu0
      %v1646 = vpop.f32.mrb[0].mxu0
      %v1647 = vadd.f32 0.0, %v1646
      %v1648 = vpop.f32.mrb[0].mxu0
      %1649 = vmatprep.mubr.bf16.mxu0 0
      %1650 = vmatmul.mubr.bf16.gmra.mrb[0].mxu0 %v1559
      %v1651 = vpop.f32.mrb[0].mxu0
      %v1652 = vadd.f32 0.0, %v1651
      %v1653 = vpop.f32.mrb[0].mxu0
      %v1654 = vpop.f32.mrb[0].mxu0
      %v1655 = vadd.f32 0.0, %v1654
      %v1656 = vpop.f32.mrb[0].mxu0
      %1657 = vdwg.mxu0
      %v1662 = vunpack.c.l.b16 %v1404
      %v1663 = vunpack.c.l.b16 %v1405
      %v1664 = vunpack.c.l.b16 %v1406
      %v1665 = vunpack.c.l.b16 %v1407
      %v1666 = vpack.c.b16 %v1663, %v1662
      %v1667 = vpack.c.b16 %v1665, %v1664
      %v1670 = vsel %vm697, %v1448, 0
      %v1672 = vsel %vm697, %v1449, 0
      %v1674 = vsel %vm697, %v1450, 0
      %v1676 = vsel %vm697, %v1451, 0
      %v1678 = vsel %vm697, %v1452, 0
      %v1680 = vsel %vm697, %v1453, 0
      %v1682 = vsel %vm697, %v1454, 0
      %v1684 = vsel %vm697, %v1455, 0
      %1686 = vmatprep.subr.bf16.mxu0 0
      %1687 = vmatpush1.bf16.msra.mxu0 %v1666
      %1688 = vmatprep.subr.bf16.mxu0 0
      %1689 = vmatpush1.bf16.msra.mxu0 %v1667
      %1690 = vmatprep.subr.bf16.mxu0 0
      %1691 = vmatpush1.bf16.msra.mxu0 0
      %1692 = vmatprep.subr.bf16.mxu0 0
      %1693 = vmatpush1.bf16.msra.mxu0 0
      %1694 = vmatprep.subr.bf16.mxu0 0
      %1695 = vmatpush1.bf16.msra.mxu0 0
      %1696 = vmatprep.subr.bf16.mxu0 0
      %1697 = vmatpush1.bf16.msra.mxu0 0
      %1698 = vmatprep.subr.bf16.mxu0 0
      %1699 = vmatpush1.bf16.msra.mxu0 0
      %1700 = vmatprep.subr.bf16.mxu0 0
      %1701 = vmatpush1.bf16.msra.mxu0 0
      %1702 = vmatprep.subr.bf16.mxu0 0
      %1703 = vmatpush1.bf16.msra.mxu0 0
      %1704 = vmatprep.subr.bf16.mxu0 0
      %1705 = vmatpush1.bf16.msra.mxu0 0
      %1706 = vmatprep.subr.bf16.mxu0 0
      %1707 = vmatpush1.bf16.msra.mxu0 0
      %1708 = vmatprep.subr.bf16.mxu0 0
      %1709 = vmatpush1.bf16.msra.mxu0 0
      %1710 = vmatprep.subr.bf16.mxu0 0
      %1711 = vmatpush1.bf16.msra.mxu0 0
      %1712 = vmatprep.subr.bf16.mxu0 0
      %1713 = vmatpush1.bf16.msra.mxu0 0
      %1714 = vmatprep.subr.bf16.mxu0 0
      %1715 = vmatpush1.bf16.msra.mxu0 0
      %1716 = vmatprep.subr.bf16.mxu0 0
      %1717 = vmatpush1.bf16.msra.mxu0 0
      %1718 = vmatprep.mubr.bf16.mxu0 0
      %1719 = vmatmul.mubr.bf16.gmra.mrb[0].mxu0 %v1670
      %v1720 = vpop.f32.mrb[0].mxu0
      %v1721 = vadd.f32 %v1596, %v1720
      %v1722 = vpop.f32.mrb[0].mxu0
      %v1723 = vpop.f32.mrb[0].mxu0
      %v1724 = vadd.f32 %v1599, %v1723
      %v1725 = vpop.f32.mrb[0].mxu0
      %1726 = vmatprep.mubr.bf16.mxu0 0
      %1727 = vmatmul.mubr.bf16.gmra.mrb[0].mxu0 %v1672
      %v1728 = vpop.f32.mrb[0].mxu0
      %v1729 = vadd.f32 %v1604, %v1728
      %v1730 = vpop.f32.mrb[0].mxu0
      %v1731 = vpop.f32.mrb[0].mxu0
      %v1732 = vadd.f32 %v1607, %v1731
      %v1733 = vpop.f32.mrb[0].mxu0
      %1734 = vmatprep.mubr.bf16.mxu0 0
      %1735 = vmatmul.mubr.bf16.gmra.mrb[0].mxu0 %v1674
      %v1736 = vpop.f32.mrb[0].mxu0
      %v1737 = vadd.f32 %v1612, %v1736
      %v1738 = vpop.f32.mrb[0].mxu0
      %v1739 = vpop.f32.mrb[0].mxu0
      %v1740 = vadd.f32 %v1615, %v1739
      %v1741 = vpop.f32.mrb[0].mxu0
      %1742 = vmatprep.mubr.bf16.mxu0 0
      %1743 = vmatmul.mubr.bf16.gmra.mrb[0].mxu0 %v1676
      %v1744 = vpop.f32.mrb[0].mxu0
      %v1745 = vadd.f32 %v1620, %v1744
      %v1746 = vpop.f32.mrb[0].mxu0
      %v1747 = vpop.f32.mrb[0].mxu0
      %v1748 = vadd.f32 %v1623, %v1747
      %v1749 = vpop.f32.mrb[0].mxu0
      %1750 = vmatprep.mubr.bf16.mxu0 0
      %1751 = vmatmul.mubr.bf16.gmra.mrb[0].mxu0 %v1678
      %v1752 = vpop.f32.mrb[0].mxu0
      %v1753 = vadd.f32 %v1628, %v1752
      %v1754 = vpop.f32.mrb[0].mxu0
      %v1755 = vpop.f32.mrb[0].mxu0
      %v1756 = vadd.f32 %v1631, %v1755
      %v1757 = vpop.f32.mrb[0].mxu0
      %1758 = vmatprep.mubr.bf16.mxu0 0
      %1759 = vmatmul.mubr.bf16.gmra.mrb[0].mxu0 %v1680
      %v1760 = vpop.f32.mrb[0].mxu0
      %v1761 = vadd.f32 %v1636, %v1760
      %v1762 = vpop.f32.mrb[0].mxu0
      %v1763 = vpop.f32.mrb[0].mxu0
      %v1764 = vadd.f32 %v1639, %v1763
      %v1765 = vpop.f32.mrb[0].mxu0
      %1766 = vmatprep.mubr.bf16.mxu0 0
      %1767 = vmatmul.mubr.bf16.gmra.mrb[0].mxu0 %v1682
      %v1768 = vpop.f32.mrb[0].mxu0
      %v1769 = vadd.f32 %v1644, %v1768
      %v1770 = vpop.f32.mrb[0].mxu0
      %v1771 = vpop.f32.mrb[0].mxu0
      %v1772 = vadd.f32 %v1647, %v1771
      %v1773 = vpop.f32.mrb[0].mxu0
      %1774 = vmatprep.mubr.bf16.mxu0 0
      %1775 = vmatmul.mubr.bf16.gmra.mrb[0].mxu0 %v1684
      %v1776 = vpop.f32.mrb[0].mxu0
      %v1777 = vadd.f32 %v1652, %v1776
      %v1778 = vpop.f32.mrb[0].mxu0
      %v1779 = vpop.f32.mrb[0].mxu0
      %v1780 = vadd.f32 %v1655, %v1779
      %v1781 = vpop.f32.mrb[0].mxu0
      %1782 = vdwg.mxu0
      %v1783 = vld [vmem:[#allocation3] sm:$0xe]
      %s1784 = scalar_lea.vmem %s3, 32
      %v1785 = vld [vmem:[%s1784] sm:$0xf]
      %v1786 = vld [vmem:[%s1784 + $0x4] sm:$0xf]
      %v1787 = vld [vmem:[%s1784 + $0x8] sm:$0xf]
      %v1788 = vld [vmem:[%s1784 + $0xc] sm:$0xf]
      %v1790 = vunpack.c.l.b16 %v1783
      %v1791 = vpack.c.b16 %v1432, %v1790
      %v1792 = vrot.slane %v1791, 1
      %v1793 = vrot.slane %v1449, 1
      %v1794 = vsel %vm953, %v1792, %v1793
      %v1795 = vrot.slane %v1450, 1
      %v1796 = vsel %vm953, %v1793, %v1795
      %v1797 = vrot.slane %v1451, 1
      %v1798 = vsel %vm953, %v1795, %v1797
      %v1799 = vrot.slane %v1452, 1
      %v1800 = vsel %vm953, %v1797, %v1799
      %v1801 = vrot.slane %v1453, 1
      %v1802 = vsel %vm953, %v1799, %v1801
      %v1803 = vrot.slane %v1454, 1
      %v1804 = vsel %vm953, %v1801, %v1803
      %v1805 = vrot.slane %v1455, 1
      %v1806 = vsel %vm953, %v1803, %v1805
      %v1807 = vrot.slane %v1456, 1
      %v1808 = vsel %vm953, %v1805, %v1807
      %v1813 = vunpack.c.l.b16 %v1785
      %v1814 = vunpack.c.l.b16 %v1786
      %v1815 = vunpack.c.l.b16 %v1787
      %v1816 = vunpack.c.l.b16 %v1788
      %v1817 = vpack.c.b16 %v1814, %v1813
      %v1818 = vpack.c.b16 %v1816, %v1815
      %v1822 = vsel %vm697, %v1794, 0
      %v1825 = vsel %vm697, %v1796, 0
      %v1828 = vsel %vm697, %v1798, 0
      %v1831 = vsel %vm697, %v1800, 0
      %v1834 = vsel %vm697, %v1802, 0
      %v1837 = vsel %vm697, %v1804, 0
      %v1840 = vsel %vm697, %v1806, 0
      %v1843 = vsel %vm697, %v1808, 0
      %1845 = vmatprep.subr.bf16.mxu0 0
      %1846 = vmatpush1.bf16.msra.mxu0 %v1817
      %1847 = vmatprep.subr.bf16.mxu0 0
      %1848 = vmatpush1.bf16.msra.mxu0 %v1818
      %1849 = vmatprep.subr.bf16.mxu0 0
      %1850 = vmatpush1.bf16.msra.mxu0 0
      %1851 = vmatprep.subr.bf16.mxu0 0
      %1852 = vmatpush1.bf16.msra.mxu0 0
      %1853 = vmatprep.subr.bf16.mxu0 0
      %1854 = vmatpush1.bf16.msra.mxu0 0
      %1855 = vmatprep.subr.bf16.mxu0 0
      %1856 = vmatpush1.bf16.msra.mxu0 0
      %1857 = vmatprep.subr.bf16.mxu0 0
      %1858 = vmatpush1.bf16.msra.mxu0 0
      %1859 = vmatprep.subr.bf16.mxu0 0
      %1860 = vmatpush1.bf16.msra.mxu0 0
      %1861 = vmatprep.subr.bf16.mxu0 0
      %1862 = vmatpush1.bf16.msra.mxu0 0
      %1863 = vmatprep.subr.bf16.mxu0 0
      %1864 = vmatpush1.bf16.msra.mxu0 0
      %1865 = vmatprep.subr.bf16.mxu0 0
      %1866 = vmatpush1.bf16.msra.mxu0 0
      %1867 = vmatprep.subr.bf16.mxu0 0
      %1868 = vmatpush1.bf16.msra.mxu0 0
      %1869 = vmatprep.subr.bf16.mxu0 0
      %1870 = vmatpush1.bf16.msra.mxu0 0
      %1871 = vmatprep.subr.bf16.mxu0 0
      %1872 = vmatpush1.bf16.msra.mxu0 0
      %1873 = vmatprep.subr.bf16.mxu0 0
      %1874 = vmatpush1.bf16.msra.mxu0 0
      %1875 = vmatprep.subr.bf16.mxu0 0
      %1876 = vmatpush1.bf16.msra.mxu0 0
      %1877 = vmatprep.mubr.bf16.mxu0 0
      %1878 = vmatmul.mubr.bf16.gmra.mrb[0].mxu0 %v1822
      %v1879 = vpop.f32.mrb[0].mxu0
      %v1880 = vadd.f32 0.0, %v1879
      %v1881 = vpop.f32.mrb[0].mxu0
      %v1882 = vpop.f32.mrb[0].mxu0
      %v1883 = vadd.f32 0.0, %v1882
      %v1884 = vpop.f32.mrb[0].mxu0
      %1885 = vmatprep.mubr.bf16.mxu0 0
      %1886 = vmatmul.mubr.bf16.gmra.mrb[0].mxu0 %v1825
      %v1887 = vpop.f32.mrb[0].mxu0
      %v1888 = vadd.f32 0.0, %v1887
      %v1889 = vpop.f32.mrb[0].mxu0
      %v1890 = vpop.f32.mrb[0].mxu0
      %v1891 = vadd.f32 0.0, %v1890
      %v1892 = vpop.f32.mrb[0].mxu0
      %1893 = vmatprep.mubr.bf16.mxu0 0
      %1894 = vmatmul.mubr.bf16.gmra.mrb[0].mxu0 %v1828
      %v1895 = vpop.f32.mrb[0].mxu0
      %v1896 = vadd.f32 0.0, %v1895
      %v1897 = vpop.f32.mrb[0].mxu0
      %v1898 = vpop.f32.mrb[0].mxu0
      %v1899 = vadd.f32 0.0, %v1898
      %v1900 = vpop.f32.mrb[0].mxu0
      %1901 = vmatprep.mubr.bf16.mxu0 0
      %1902 = vmatmul.mubr.bf16.gmra.mrb[0].mxu0 %v1831
      %v1903 = vpop.f32.mrb[0].mxu0
      %v1904 = vadd.f32 0.0, %v1903
      %v1905 = vpop.f32.mrb[0].mxu0
      %v1906 = vpop.f32.mrb[0].mxu0
      %v1907 = vadd.f32 0.0, %v1906
      %v1908 = vpop.f32.mrb[0].mxu0
      %1909 = vmatprep.mubr.bf16.mxu0 0
      %1910 = vmatmul.mubr.bf16.gmra.mrb[0].mxu0 %v1834
      %v1911 = vpop.f32.mrb[0].mxu0
      %v1912 = vadd.f32 0.0, %v1911
      %v1913 = vpop.f32.mrb[0].mxu0
      %v1914 = vpop.f32.mrb[0].mxu0
      %v1915 = vadd.f32 0.0, %v1914
      %v1916 = vpop.f32.mrb[0].mxu0
      %1917 = vmatprep.mubr.bf16.mxu0 0
      %1918 = vmatmul.mubr.bf16.gmra.mrb[0].mxu0 %v1837
      %v1919 = vpop.f32.mrb[0].mxu0
      %v1920 = vadd.f32 0.0, %v1919
      %v1921 = vpop.f32.mrb[0].mxu0
      %v1922 = vpop.f32.mrb[0].mxu0
      %v1923 = vadd.f32 0.0, %v1922
      %v1924 = vpop.f32.mrb[0].mxu0
      %1925 = vmatprep.mubr.bf16.mxu0 0
      %1926 = vmatmul.mubr.bf16.gmra.mrb[0].mxu0 %v1840
      %v1927 = vpop.f32.mrb[0].mxu0
      %v1928 = vadd.f32 0.0, %v1927
      %v1929 = vpop.f32.mrb[0].mxu0
      %v1930 = vpop.f32.mrb[0].mxu0
      %v1931 = vadd.f32 0.0, %v1930
      %v1932 = vpop.f32.mrb[0].mxu0
      %1933 = vmatprep.mubr.bf16.mxu0 0
      %1934 = vmatmul.mubr.bf16.gmra.mrb[0].mxu0 %v1843
      %v1935 = vpop.f32.mrb[0].mxu0
      %v1936 = vadd.f32 0.0, %v1935
      %v1937 = vpop.f32.mrb[0].mxu0
      %v1938 = vpop.f32.mrb[0].mxu0
      %v1939 = vadd.f32 0.0, %v1938
      %v1940 = vpop.f32.mrb[0].mxu0
      %1941 = vdwg.mxu0
      %v1942 = vadd.f32 %v1721, %v1880
      %v1943 = vadd.f32 %v1724, %v1883
      %v1944 = vadd.f32 %v1729, %v1888
      %v1945 = vadd.f32 %v1732, %v1891
      %v1946 = vadd.f32 %v1737, %v1896
      %v1947 = vadd.f32 %v1740, %v1899
      %v1948 = vadd.f32 %v1745, %v1904
      %v1949 = vadd.f32 %v1748, %v1907
      %v1950 = vadd.f32 %v1753, %v1912
      %v1951 = vadd.f32 %v1756, %v1915
      %v1952 = vadd.f32 %v1761, %v1920
      %v1953 = vadd.f32 %v1764, %v1923
      %v1954 = vadd.f32 %v1769, %v1928
      %v1955 = vadd.f32 %v1772, %v1931
      %v1956 = vadd.f32 %v1777, %v1936
      %v1957 = vadd.f32 %v1780, %v1939
      %v1958 = vld [vmem:[%s4] sm:$0x1]
      %v1960 = vlaneseq
      %v1961 = vshrl.u32 %v1960, 7
      %v1962 = vsub.s32 0, %v1961
      %v1963 = vrot.slane %v1958, %v1962
      %v1965 = vadd.f32 %v1942, %v1963
      %v1966 = vadd.f32 %v1943, %v1963
      %v1967 = vadd.f32 %v1944, %v1963
      %v1968 = vadd.f32 %v1945, %v1963
      %v1969 = vadd.f32 %v1946, %v1963
      %v1970 = vadd.f32 %v1947, %v1963
      %v1971 = vadd.f32 %v1948, %v1963
      %v1972 = vadd.f32 %v1949, %v1963
      %v1973 = vadd.f32 %v1950, %v1963
      %v1974 = vadd.f32 %v1951, %v1963
      %v1975 = vadd.f32 %v1952, %v1963
      %v1976 = vadd.f32 %v1953, %v1963
      %v1977 = vadd.f32 %v1954, %v1963
      %v1978 = vadd.f32 %v1955, %v1963
      %v1979 = vadd.f32 %v1956, %v1963
      %v1980 = vadd.f32 %v1957, %v1963
      %v1981 = vmax.f32 %v1965, 0.0
      %v1982 = vmax.f32 %v1966, 0.0
      %v1983 = vmax.f32 %v1967, 0.0
      %v1984 = vmax.f32 %v1968, 0.0
      %v1985 = vmax.f32 %v1969, 0.0
      %v1986 = vmax.f32 %v1970, 0.0
      %v1987 = vmax.f32 %v1971, 0.0
      %v1988 = vmax.f32 %v1972, 0.0
      %v1989 = vmax.f32 %v1973, 0.0
      %v1990 = vmax.f32 %v1974, 0.0
      %v1991 = vmax.f32 %v1975, 0.0
      %v1992 = vmax.f32 %v1976, 0.0
      %v1993 = vmax.f32 %v1977, 0.0
      %v1994 = vmax.f32 %v1978, 0.0
      %v1995 = vmax.f32 %v1979, 0.0
      %v1996 = vmax.f32 %v1980, 0.0
      %v1997 = vpack.c.bf16 %v1982, %v1981
      %v1998 = vpack.c.bf16 %v1984, %v1983
      %v1999 = vpack.c.bf16 %v1986, %v1985
      %v2000 = vpack.c.bf16 %v1988, %v1987
      %v2001 = vpack.c.bf16 %v1990, %v1989
      %v2002 = vpack.c.bf16 %v1992, %v1991
      %v2003 = vpack.c.bf16 %v1994, %v1993
      %v2004 = vpack.c.bf16 %v1996, %v1995
      %v2013 = vunpack.c.l.b16 %v1997
      %v2014 = vunpack.c.h.b16 %v1997
      %v2015 = vunpack.c.l.b16 %v1998
      %v2016 = vunpack.c.h.b16 %v1998
      %v2017 = vunpack.c.l.b16 %v1999
      %v2018 = vunpack.c.h.b16 %v1999
      %v2019 = vunpack.c.l.b16 %v2000
      %v2020 = vunpack.c.h.b16 %v2000
      %v2021 = vunpack.c.l.b16 %v2001
      %v2022 = vunpack.c.h.b16 %v2001
      %v2023 = vunpack.c.l.b16 %v2002
      %v2024 = vunpack.c.h.b16 %v2002
      %v2025 = vunpack.c.l.b16 %v2003
      %v2026 = vunpack.c.h.b16 %v2003
      %v2027 = vunpack.c.l.b16 %v2004
      %v2028 = vunpack.c.h.b16 %v2004
      %v2029 = vpack.c.b16 %v2013, %v2013
      %v2030 = vpack.c.b16 %v2014, %v2014
      %v2031 = vpack.c.b16 %v2015, %v2015
      %v2032 = vpack.c.b16 %v2016, %v2016
      %v2033 = vpack.c.b16 %v2017, %v2017
      %v2034 = vpack.c.b16 %v2018, %v2018
      %v2035 = vpack.c.b16 %v2019, %v2019
      %v2036 = vpack.c.b16 %v2020, %v2020
      %v2037 = vpack.c.b16 %v2021, %v2021
      %v2038 = vpack.c.b16 %v2022, %v2022
      %v2039 = vpack.c.b16 %v2023, %v2023
      %v2040 = vpack.c.b16 %v2024, %v2024
      %v2041 = vpack.c.b16 %v2025, %v2025
      %v2042 = vpack.c.b16 %v2026, %v2026
      %v2043 = vpack.c.b16 %v2027, %v2027
      %v2044 = vpack.c.b16 %v2028, %v2028
      %v2046 = vshrl.u32 %v2029, 16
      %v2048 = vrot.slane %v2046, 7
      %v2049 = vshll.u32 %v2029, 16
      %v2051 = vor.u32 %v2048, %v2049
      %v2052 = vrot.slane %v2048, 4
      %v2054 = vshrl.u32 %v2030, 16
      %v2056 = vrot.slane %v2054, 7
      %v2057 = vshll.u32 %v2030, 16
      %v2059 = vor.u32 %v2056, %v2057
      %v2060 = vsel %vm362, %v2052, %v2059
      %v2061 = vrot.slane %v2056, 4
      %v2063 = vshrl.u32 %v2031, 16
      %v2065 = vrot.slane %v2063, 7
      %v2066 = vshll.u32 %v2031, 16
      %v2068 = vor.u32 %v2065, %v2066
      %v2069 = vsel %vm362, %v2061, %v2068
      %v2070 = vrot.slane %v2065, 4
      %v2072 = vshrl.u32 %v2032, 16
      %v2074 = vrot.slane %v2072, 7
      %v2075 = vshll.u32 %v2032, 16
      %v2077 = vor.u32 %v2074, %v2075
      %v2078 = vsel %vm362, %v2070, %v2077
      %v2079 = vrot.slane %v2074, 4
      %v2081 = vshrl.u32 %v2033, 16
      %v2083 = vrot.slane %v2081, 7
      %v2084 = vshll.u32 %v2033, 16
      %v2086 = vor.u32 %v2083, %v2084
      %v2087 = vsel %vm362, %v2079, %v2086
      %v2088 = vrot.slane %v2083, 4
      %v2090 = vshrl.u32 %v2034, 16
      %v2092 = vrot.slane %v2090, 7
      %v2093 = vshll.u32 %v2034, 16
      %v2095 = vor.u32 %v2092, %v2093
      %v2096 = vsel %vm362, %v2088, %v2095
      %v2097 = vrot.slane %v2092, 4
      %v2099 = vshrl.u32 %v2035, 16
      %v2101 = vrot.slane %v2099, 7
      %v2102 = vshll.u32 %v2035, 16
      %v2104 = vor.u32 %v2101, %v2102
      %v2105 = vsel %vm362, %v2097, %v2104
      %v2106 = vrot.slane %v2101, 4
      %v2108 = vshrl.u32 %v2036, 16
      %v2110 = vrot.slane %v2108, 7
      %v2111 = vshll.u32 %v2036, 16
      %v2113 = vor.u32 %v2110, %v2111
      %v2114 = vsel %vm362, %v2106, %v2113
      %v2115 = vrot.slane %v2110, 4
      %v2117 = vshrl.u32 %v2037, 16
      %v2119 = vrot.slane %v2117, 7
      %v2120 = vshll.u32 %v2037, 16
      %v2122 = vor.u32 %v2119, %v2120
      %v2123 = vsel %vm362, %v2115, %v2122
      %v2124 = vrot.slane %v2119, 4
      %v2126 = vshrl.u32 %v2038, 16
      %v2128 = vrot.slane %v2126, 7
      %v2129 = vshll.u32 %v2038, 16
      %v2131 = vor.u32 %v2128, %v2129
      %v2132 = vsel %vm362, %v2124, %v2131
      %v2133 = vrot.slane %v2128, 4
      %v2135 = vshrl.u32 %v2039, 16
      %v2137 = vrot.slane %v2135, 7
      %v2138 = vshll.u32 %v2039, 16
      %v2140 = vor.u32 %v2137, %v2138
      %v2141 = vsel %vm362, %v2133, %v2140
      %v2142 = vrot.slane %v2137, 4
      %v2144 = vshrl.u32 %v2040, 16
      %v2146 = vrot.slane %v2144, 7
      %v2147 = vshll.u32 %v2040, 16
      %v2149 = vor.u32 %v2146, %v2147
      %v2150 = vsel %vm362, %v2142, %v2149
      %v2151 = vrot.slane %v2146, 4
      %v2153 = vshrl.u32 %v2041, 16
      %v2155 = vrot.slane %v2153, 7
      %v2156 = vshll.u32 %v2041, 16
      %v2158 = vor.u32 %v2155, %v2156
      %v2159 = vsel %vm362, %v2151, %v2158
      %v2160 = vrot.slane %v2155, 4
      %v2162 = vshrl.u32 %v2042, 16
      %v2164 = vrot.slane %v2162, 7
      %v2165 = vshll.u32 %v2042, 16
      %v2167 = vor.u32 %v2164, %v2165
      %v2168 = vsel %vm362, %v2160, %v2167
      %v2169 = vrot.slane %v2164, 4
      %v2171 = vshrl.u32 %v2043, 16
      %v2173 = vrot.slane %v2171, 7
      %v2174 = vshll.u32 %v2043, 16
      %v2176 = vor.u32 %v2173, %v2174
      %v2177 = vsel %vm362, %v2169, %v2176
      %v2178 = vrot.slane %v2173, 4
      %v2180 = vshrl.u32 %v2044, 16
      %v2182 = vrot.slane %v2180, 7
      %v2183 = vshll.u32 %v2044, 16
      %v2185 = vor.u32 %v2182, %v2183
      %v2186 = vsel %vm362, %v2178, %v2185
      %v2187 = vrot.slane %v2182, 4
      %v2205 = vld [vmem:[#allocation2] sm:$0xf]
      %v2206 = vsel %vm524, %v2051, %v2205
      %2207 = vst [vmem:[#allocation2] sm:$0xf] %v2206
      %2208 = vst.msk [vmem:[#allocation2 + $0x4] sm:$0xf] %vm528, %v2060
      %2209 = vst.msk [vmem:[#allocation2 + $0x8] sm:$0xf] %vm528, %v2069
      %2210 = vst.msk [vmem:[#allocation2 + $0xc] sm:$0xf] %vm528, %v2078
      %2211 = vst.msk [vmem:[#allocation2 + $0x10] sm:$0xf] %vm528, %v2087
      %2212 = vst.msk [vmem:[#allocation2 + $0x14] sm:$0xf] %vm528, %v2096
      %2213 = vst.msk [vmem:[#allocation2 + $0x18] sm:$0xf] %vm528, %v2105
      %2214 = vst.msk [vmem:[#allocation2 + $0x1c] sm:$0xf] %vm528, %v2114
      %2215 = vst.msk [vmem:[#allocation2 + $0x20] sm:$0xf] %vm528, %v2123
      %2216 = vst.msk [vmem:[#allocation2 + $0x24] sm:$0xf] %vm528, %v2132
      %2217 = vst.msk [vmem:[#allocation2 + $0x28] sm:$0xf] %vm528, %v2141
      %2218 = vst.msk [vmem:[#allocation2 + $0x2c] sm:$0xf] %vm528, %v2150
      %2219 = vst.msk [vmem:[#allocation2 + $0x30] sm:$0xf] %vm528, %v2159
      %2220 = vst.msk [vmem:[#allocation2 + $0x34] sm:$0xf] %vm528, %v2168
      %2221 = vst.msk [vmem:[#allocation2 + $0x38] sm:$0xf] %vm528, %v2177
      %2222 = vst.msk [vmem:[#allocation2 + $0x3c] sm:$0xf] %vm528, %v2186
      %v2223 = vld [vmem:[#allocation2 + $0x40] sm:$0x1]
      %v2224 = vsel %vm282, %v2187, %v2223
      %2225 = vst [vmem:[#allocation2 + $0x40] sm:$0x1] %v2224
      %v2226 = vld [vmem:[#allocation2] sm:$0xf]
      %v2227 = vld [vmem:[#allocation2 + $0x4] sm:$0xf]
      %v2228 = vld [vmem:[#allocation2 + $0x8] sm:$0xf]
      %v2229 = vld [vmem:[#allocation2 + $0xc] sm:$0xf]
      %v2230 = vld [vmem:[#allocation2 + $0x10] sm:$0xf]
      %v2231 = vld [vmem:[#allocation2 + $0x14] sm:$0xf]
      %v2232 = vld [vmem:[#allocation2 + $0x18] sm:$0xf]
      %v2233 = vld [vmem:[#allocation2 + $0x1c] sm:$0xf]
      %v2234 = vld [vmem:[#allocation2 + $0x20] sm:$0xf]
      %v2235 = vld [vmem:[#allocation2 + $0x24] sm:$0xf]
      %v2236 = vld [vmem:[#allocation2 + $0x28] sm:$0xf]
      %v2237 = vld [vmem:[#allocation2 + $0x2c] sm:$0xf]
      %v2238 = vld [vmem:[#allocation2 + $0x30] sm:$0xf]
      %v2239 = vld [vmem:[#allocation2 + $0x34] sm:$0xf]
      %v2240 = vld [vmem:[#allocation2 + $0x38] sm:$0xf]
      %v2241 = vld [vmem:[#allocation2 + $0x3c] sm:$0xf]
      %v2242 = vld [vmem:[%s5] sm:$0xf]
      %v2243 = vld [vmem:[%s5 + $0x4] sm:$0xf]
      %v2244 = vld [vmem:[%s5 + $0x8] sm:$0xf]
      %v2245 = vld [vmem:[%s5 + $0xc] sm:$0xf]
      %v2246 = vld [vmem:[#allocation2 + $0x40] sm:$0x1]
      %s2247 = scalar_lea.vmem %s5, 16
      %v2248 = vld [vmem:[%s2247] sm:$0xf]
      %v2249 = vld [vmem:[%s2247 + $0x4] sm:$0xf]
      %v2250 = vld [vmem:[%s2247 + $0x8] sm:$0xf]
      %v2251 = vld [vmem:[%s2247 + $0xc] sm:$0xf]
      %v2269 = vunpack.c.l.b16 %v2226
      %v2270 = vunpack.c.l.b16 %v2227
      %v2271 = vunpack.c.l.b16 %v2228
      %v2272 = vunpack.c.l.b16 %v2229
      %v2273 = vunpack.c.l.b16 %v2230
      %v2274 = vunpack.c.l.b16 %v2231
      %v2275 = vunpack.c.l.b16 %v2232
      %v2276 = vunpack.c.l.b16 %v2233
      %v2277 = vunpack.c.l.b16 %v2234
      %v2278 = vunpack.c.l.b16 %v2235
      %v2279 = vunpack.c.l.b16 %v2236
      %v2280 = vunpack.c.l.b16 %v2237
      %v2281 = vunpack.c.l.b16 %v2238
      %v2282 = vunpack.c.l.b16 %v2239
      %v2283 = vunpack.c.l.b16 %v2240
      %v2284 = vunpack.c.l.b16 %v2241
      %v2285 = vunpack.c.l.b16 %v2246
      %v2286 = vpack.c.b16 %v2270, %v2269
      %v2287 = vpack.c.b16 %v2272, %v2271
      %v2288 = vpack.c.b16 %v2274, %v2273
      %v2289 = vpack.c.b16 %v2276, %v2275
      %v2290 = vpack.c.b16 %v2278, %v2277
      %v2291 = vpack.c.b16 %v2280, %v2279
      %v2292 = vpack.c.b16 %v2282, %v2281
      %v2293 = vpack.c.b16 %v2284, %v2283
      %v2294 = vpack.c.b16 %v2285, %v2285
      %v2296 = vshrl.u32 %v2286, 16
      %v2298 = vshll.u32 %v2286, 16
      %v2300 = vrot.slane %v2298, 1
      %v2301 = vor.u32 %v2296, %v2300
      %v2303 = vshll.u32 %v2287, 16
      %v2305 = vrot.slane %v2303, 1
      %v2306 = vsel %vm616, %v2301, %v2305
      %v2307 = vshrl.u32 %v2287, 16
      %v2309 = vor.u32 %v2307, %v2305
      %v2311 = vshll.u32 %v2288, 16
      %v2313 = vrot.slane %v2311, 1
      %v2314 = vsel %vm616, %v2309, %v2313
      %v2315 = vshrl.u32 %v2288, 16
      %v2317 = vor.u32 %v2315, %v2313
      %v2319 = vshll.u32 %v2289, 16
      %v2321 = vrot.slane %v2319, 1
      %v2322 = vsel %vm616, %v2317, %v2321
      %v2323 = vshrl.u32 %v2289, 16
      %v2325 = vor.u32 %v2323, %v2321
      %v2327 = vshll.u32 %v2290, 16
      %v2329 = vrot.slane %v2327, 1
      %v2330 = vsel %vm616, %v2325, %v2329
      %v2331 = vshrl.u32 %v2290, 16
      %v2333 = vor.u32 %v2331, %v2329
      %v2335 = vshll.u32 %v2291, 16
      %v2337 = vrot.slane %v2335, 1
      %v2338 = vsel %vm616, %v2333, %v2337
      %v2339 = vshrl.u32 %v2291, 16
      %v2341 = vor.u32 %v2339, %v2337
      %v2343 = vshll.u32 %v2292, 16
      %v2345 = vrot.slane %v2343, 1
      %v2346 = vsel %vm616, %v2341, %v2345
      %v2347 = vshrl.u32 %v2292, 16
      %v2349 = vor.u32 %v2347, %v2345
      %v2351 = vshll.u32 %v2293, 16
      %v2353 = vrot.slane %v2351, 1
      %v2354 = vsel %vm616, %v2349, %v2353
      %v2355 = vshrl.u32 %v2293, 16
      %v2357 = vor.u32 %v2355, %v2353
      %v2359 = vshll.u32 %v2294, 16
      %v2361 = vrot.slane %v2359, 1
      %v2362 = vsel %vm616, %v2357, %v2361
      %v2367 = vunpack.c.l.b16 %v2248
      %v2368 = vunpack.c.l.b16 %v2249
      %v2369 = vunpack.c.l.b16 %v2250
      %v2370 = vunpack.c.l.b16 %v2251
      %v2371 = vpack.c.b16 %v2368, %v2367
      %v2372 = vpack.c.b16 %v2370, %v2369
      %v2376 = vsel %vm697, %v2306, 0
      %v2379 = vsel %vm697, %v2314, 0
      %v2382 = vsel %vm697, %v2322, 0
      %v2385 = vsel %vm697, %v2330, 0
      %v2388 = vsel %vm697, %v2338, 0
      %v2391 = vsel %vm697, %v2346, 0
      %v2394 = vsel %vm697, %v2354, 0
      %v2397 = vsel %vm697, %v2362, 0
      %2399 = vmatprep.subr.bf16.mxu0 0
      %2400 = vmatpush1.bf16.msra.mxu0 %v2371
      %2401 = vmatprep.subr.bf16.mxu0 0
      %2402 = vmatpush1.bf16.msra.mxu0 %v2372
      %2403 = vmatprep.subr.bf16.mxu0 0
      %2404 = vmatpush1.bf16.msra.mxu0 0
      %2405 = vmatprep.subr.bf16.mxu0 0
      %2406 = vmatpush1.bf16.msra.mxu0 0
      %2407 = vmatprep.subr.bf16.mxu0 0
      %2408 = vmatpush1.bf16.msra.mxu0 0
      %2409 = vmatprep.subr.bf16.mxu0 0
      %2410 = vmatpush1.bf16.msra.mxu0 0
      %2411 = vmatprep.subr.bf16.mxu0 0
      %2412 = vmatpush1.bf16.msra.mxu0 0
      %2413 = vmatprep.subr.bf16.mxu0 0
      %2414 = vmatpush1.bf16.msra.mxu0 0
      %2415 = vmatprep.subr.bf16.mxu0 0
      %2416 = vmatpush1.bf16.msra.mxu0 0
      %2417 = vmatprep.subr.bf16.mxu0 0
      %2418 = vmatpush1.bf16.msra.mxu0 0
      %2419 = vmatprep.subr.bf16.mxu0 0
      %2420 = vmatpush1.bf16.msra.mxu0 0
      %2421 = vmatprep.subr.bf16.mxu0 0
      %2422 = vmatpush1.bf16.msra.mxu0 0
      %2423 = vmatprep.subr.bf16.mxu0 0
      %2424 = vmatpush1.bf16.msra.mxu0 0
      %2425 = vmatprep.subr.bf16.mxu0 0
      %2426 = vmatpush1.bf16.msra.mxu0 0
      %2427 = vmatprep.subr.bf16.mxu0 0
      %2428 = vmatpush1.bf16.msra.mxu0 0
      %2429 = vmatprep.subr.bf16.mxu0 0
      %2430 = vmatpush1.bf16.msra.mxu0 0
      %2431 = vmatprep.mubr.bf16.mxu0 0
      %2432 = vmatmul.mubr.bf16.gmra.mrb[0].mxu0 %v2376
      %v2433 = vpop.f32.mrb[0].mxu0
      %v2434 = vadd.f32 0.0, %v2433
      %v2435 = vpop.f32.mrb[0].mxu0
      %v2436 = vpop.f32.mrb[0].mxu0
      %v2437 = vadd.f32 0.0, %v2436
      %v2438 = vpop.f32.mrb[0].mxu0
      %2439 = vmatprep.mubr.bf16.mxu0 0
      %2440 = vmatmul.mubr.bf16.gmra.mrb[0].mxu0 %v2379
      %v2441 = vpop.f32.mrb[0].mxu0
      %v2442 = vadd.f32 0.0, %v2441
      %v2443 = vpop.f32.mrb[0].mxu0
      %v2444 = vpop.f32.mrb[0].mxu0
      %v2445 = vadd.f32 0.0, %v2444
      %v2446 = vpop.f32.mrb[0].mxu0
      %2447 = vmatprep.mubr.bf16.mxu0 0
      %2448 = vmatmul.mubr.bf16.gmra.mrb[0].mxu0 %v2382
      %v2449 = vpop.f32.mrb[0].mxu0
      %v2450 = vadd.f32 0.0, %v2449
      %v2451 = vpop.f32.mrb[0].mxu0
      %v2452 = vpop.f32.mrb[0].mxu0
      %v2453 = vadd.f32 0.0, %v2452
      %v2454 = vpop.f32.mrb[0].mxu0
      %2455 = vmatprep.mubr.bf16.mxu0 0
      %2456 = vmatmul.mubr.bf16.gmra.mrb[0].mxu0 %v2385
      %v2457 = vpop.f32.mrb[0].mxu0
      %v2458 = vadd.f32 0.0, %v2457
      %v2459 = vpop.f32.mrb[0].mxu0
      %v2460 = vpop.f32.mrb[0].mxu0
      %v2461 = vadd.f32 0.0, %v2460
      %v2462 = vpop.f32.mrb[0].mxu0
      %2463 = vmatprep.mubr.bf16.mxu0 0
      %2464 = vmatmul.mubr.bf16.gmra.mrb[0].mxu0 %v2388
      %v2465 = vpop.f32.mrb[0].mxu0
      %v2466 = vadd.f32 0.0, %v2465
      %v2467 = vpop.f32.mrb[0].mxu0
      %v2468 = vpop.f32.mrb[0].mxu0
      %v2469 = vadd.f32 0.0, %v2468
      %v2470 = vpop.f32.mrb[0].mxu0
      %2471 = vmatprep.mubr.bf16.mxu0 0
      %2472 = vmatmul.mubr.bf16.gmra.mrb[0].mxu0 %v2391
      %v2473 = vpop.f32.mrb[0].mxu0
      %v2474 = vadd.f32 0.0, %v2473
      %v2475 = vpop.f32.mrb[0].mxu0
      %v2476 = vpop.f32.mrb[0].mxu0
      %v2477 = vadd.f32 0.0, %v2476
      %v2478 = vpop.f32.mrb[0].mxu0
      %2479 = vmatprep.mubr.bf16.mxu0 0
      %2480 = vmatmul.mubr.bf16.gmra.mrb[0].mxu0 %v2394
      %v2481 = vpop.f32.mrb[0].mxu0
      %v2482 = vadd.f32 0.0, %v2481
      %v2483 = vpop.f32.mrb[0].mxu0
      %v2484 = vpop.f32.mrb[0].mxu0
      %v2485 = vadd.f32 0.0, %v2484
      %v2486 = vpop.f32.mrb[0].mxu0
      %2487 = vmatprep.mubr.bf16.mxu0 0
      %2488 = vmatmul.mubr.bf16.gmra.mrb[0].mxu0 %v2397
      %v2489 = vpop.f32.mrb[0].mxu0
      %v2490 = vadd.f32 0.0, %v2489
      %v2491 = vpop.f32.mrb[0].mxu0
      %v2492 = vpop.f32.mrb[0].mxu0
      %v2493 = vadd.f32 0.0, %v2492
      %v2494 = vpop.f32.mrb[0].mxu0
      %2495 = vdwg.mxu0
      %v2500 = vunpack.c.l.b16 %v2242
      %v2501 = vunpack.c.l.b16 %v2243
      %v2502 = vunpack.c.l.b16 %v2244
      %v2503 = vunpack.c.l.b16 %v2245
      %v2504 = vpack.c.b16 %v2501, %v2500
      %v2505 = vpack.c.b16 %v2503, %v2502
      %v2508 = vsel %vm697, %v2286, 0
      %v2510 = vsel %vm697, %v2287, 0
      %v2512 = vsel %vm697, %v2288, 0
      %v2514 = vsel %vm697, %v2289, 0
      %v2516 = vsel %vm697, %v2290, 0
      %v2518 = vsel %vm697, %v2291, 0
      %v2520 = vsel %vm697, %v2292, 0
      %v2522 = vsel %vm697, %v2293, 0
      %2524 = vmatprep.subr.bf16.mxu0 0
      %2525 = vmatpush1.bf16.msra.mxu0 %v2504
      %2526 = vmatprep.subr.bf16.mxu0 0
      %2527 = vmatpush1.bf16.msra.mxu0 %v2505
      %2528 = vmatprep.subr.bf16.mxu0 0
      %2529 = vmatpush1.bf16.msra.mxu0 0
      %2530 = vmatprep.subr.bf16.mxu0 0
      %2531 = vmatpush1.bf16.msra.mxu0 0
      %2532 = vmatprep.subr.bf16.mxu0 0
      %2533 = vmatpush1.bf16.msra.mxu0 0
      %2534 = vmatprep.subr.bf16.mxu0 0
      %2535 = vmatpush1.bf16.msra.mxu0 0
      %2536 = vmatprep.subr.bf16.mxu0 0
      %2537 = vmatpush1.bf16.msra.mxu0 0
      %2538 = vmatprep.subr.bf16.mxu0 0
      %2539 = vmatpush1.bf16.msra.mxu0 0
      %2540 = vmatprep.subr.bf16.mxu0 0
      %2541 = vmatpush1.bf16.msra.mxu0 0
      %2542 = vmatprep.subr.bf16.mxu0 0
      %2543 = vmatpush1.bf16.msra.mxu0 0
      %2544 = vmatprep.subr.bf16.mxu0 0
      %2545 = vmatpush1.bf16.msra.mxu0 0
      %2546 = vmatprep.subr.bf16.mxu0 0
      %2547 = vmatpush1.bf16.msra.mxu0 0
      %2548 = vmatprep.subr.bf16.mxu0 0
      %2549 = vmatpush1.bf16.msra.mxu0 0
      %2550 = vmatprep.subr.bf16.mxu0 0
      %2551 = vmatpush1.bf16.msra.mxu0 0
      %2552 = vmatprep.subr.bf16.mxu0 0
      %2553 = vmatpush1.bf16.msra.mxu0 0
      %2554 = vmatprep.subr.bf16.mxu0 0
      %2555 = vmatpush1.bf16.msra.mxu0 0
      %2556 = vmatprep.mubr.bf16.mxu0 0
      %2557 = vmatmul.mubr.bf16.gmra.mrb[0].mxu0 %v2508
      %v2558 = vpop.f32.mrb[0].mxu0
      %v2559 = vadd.f32 %v2434, %v2558
      %v2560 = vpop.f32.mrb[0].mxu0
      %v2561 = vpop.f32.mrb[0].mxu0
      %v2562 = vadd.f32 %v2437, %v2561
      %v2563 = vpop.f32.mrb[0].mxu0
      %2564 = vmatprep.mubr.bf16.mxu0 0
      %2565 = vmatmul.mubr.bf16.gmra.mrb[0].mxu0 %v2510
      %v2566 = vpop.f32.mrb[0].mxu0
      %v2567 = vadd.f32 %v2442, %v2566
      %v2568 = vpop.f32.mrb[0].mxu0
      %v2569 = vpop.f32.mrb[0].mxu0
      %v2570 = vadd.f32 %v2445, %v2569
      %v2571 = vpop.f32.mrb[0].mxu0
      %2572 = vmatprep.mubr.bf16.mxu0 0
      %2573 = vmatmul.mubr.bf16.gmra.mrb[0].mxu0 %v2512
      %v2574 = vpop.f32.mrb[0].mxu0
      %v2575 = vadd.f32 %v2450, %v2574
      %v2576 = vpop.f32.mrb[0].mxu0
      %v2577 = vpop.f32.mrb[0].mxu0
      %v2578 = vadd.f32 %v2453, %v2577
      %v2579 = vpop.f32.mrb[0].mxu0
      %2580 = vmatprep.mubr.bf16.mxu0 0
      %2581 = vmatmul.mubr.bf16.gmra.mrb[0].mxu0 %v2514
      %v2582 = vpop.f32.mrb[0].mxu0
      %v2583 = vadd.f32 %v2458, %v2582
      %v2584 = vpop.f32.mrb[0].mxu0
      %v2585 = vpop.f32.mrb[0].mxu0
      %v2586 = vadd.f32 %v2461, %v2585
      %v2587 = vpop.f32.mrb[0].mxu0
      %2588 = vmatprep.mubr.bf16.mxu0 0
      %2589 = vmatmul.mubr.bf16.gmra.mrb[0].mxu0 %v2516
      %v2590 = vpop.f32.mrb[0].mxu0
      %v2591 = vadd.f32 %v2466, %v2590
      %v2592 = vpop.f32.mrb[0].mxu0
      %v2593 = vpop.f32.mrb[0].mxu0
      %v2594 = vadd.f32 %v2469, %v2593
      %v2595 = vpop.f32.mrb[0].mxu0
      %2596 = vmatprep.mubr.bf16.mxu0 0
      %2597 = vmatmul.mubr.bf16.gmra.mrb[0].mxu0 %v2518
      %v2598 = vpop.f32.mrb[0].mxu0
      %v2599 = vadd.f32 %v2474, %v2598
      %v2600 = vpop.f32.mrb[0].mxu0
      %v2601 = vpop.f32.mrb[0].mxu0
      %v2602 = vadd.f32 %v2477, %v2601
      %v2603 = vpop.f32.mrb[0].mxu0
      %2604 = vmatprep.mubr.bf16.mxu0 0
      %2605 = vmatmul.mubr.bf16.gmra.mrb[0].mxu0 %v2520
      %v2606 = vpop.f32.mrb[0].mxu0
      %v2607 = vadd.f32 %v2482, %v2606
      %v2608 = vpop.f32.mrb[0].mxu0
      %v2609 = vpop.f32.mrb[0].mxu0
      %v2610 = vadd.f32 %v2485, %v2609
      %v2611 = vpop.f32.mrb[0].mxu0
      %2612 = vmatprep.mubr.bf16.mxu0 0
      %2613 = vmatmul.mubr.bf16.gmra.mrb[0].mxu0 %v2522
      %v2614 = vpop.f32.mrb[0].mxu0
      %v2615 = vadd.f32 %v2490, %v2614
      %v2616 = vpop.f32.mrb[0].mxu0
      %v2617 = vpop.f32.mrb[0].mxu0
      %v2618 = vadd.f32 %v2493, %v2617
      %v2619 = vpop.f32.mrb[0].mxu0
      %2620 = vdwg.mxu0
      %v2621 = vld [vmem:[#allocation2] sm:$0xe]
      %s2622 = scalar_lea.vmem %s5, 32
      %v2623 = vld [vmem:[%s2622] sm:$0xf]
      %v2624 = vld [vmem:[%s2622 + $0x4] sm:$0xf]
      %v2625 = vld [vmem:[%s2622 + $0x8] sm:$0xf]
      %v2626 = vld [vmem:[%s2622 + $0xc] sm:$0xf]
      %v2628 = vunpack.c.l.b16 %v2621
      %v2629 = vpack.c.b16 %v2270, %v2628
      %v2630 = vrot.slane %v2629, 1
      %v2631 = vrot.slane %v2287, 1
      %v2632 = vsel %vm953, %v2630, %v2631
      %v2633 = vrot.slane %v2288, 1
      %v2634 = vsel %vm953, %v2631, %v2633
      %v2635 = vrot.slane %v2289, 1
      %v2636 = vsel %vm953, %v2633, %v2635
      %v2637 = vrot.slane %v2290, 1
      %v2638 = vsel %vm953, %v2635, %v2637
      %v2639 = vrot.slane %v2291, 1
      %v2640 = vsel %vm953, %v2637, %v2639
      %v2641 = vrot.slane %v2292, 1
      %v2642 = vsel %vm953, %v2639, %v2641
      %v2643 = vrot.slane %v2293, 1
      %v2644 = vsel %vm953, %v2641, %v2643
      %v2645 = vrot.slane %v2294, 1
      %v2646 = vsel %vm953, %v2643, %v2645
      %v2651 = vunpack.c.l.b16 %v2623
      %v2652 = vunpack.c.l.b16 %v2624
      %v2653 = vunpack.c.l.b16 %v2625
      %v2654 = vunpack.c.l.b16 %v2626
      %v2655 = vpack.c.b16 %v2652, %v2651
      %v2656 = vpack.c.b16 %v2654, %v2653
      %v2660 = vsel %vm697, %v2632, 0
      %v2663 = vsel %vm697, %v2634, 0
      %v2666 = vsel %vm697, %v2636, 0
      %v2669 = vsel %vm697, %v2638, 0
      %v2672 = vsel %vm697, %v2640, 0
      %v2675 = vsel %vm697, %v2642, 0
      %v2678 = vsel %vm697, %v2644, 0
      %v2681 = vsel %vm697, %v2646, 0
      %2683 = vmatprep.subr.bf16.mxu0 0
      %2684 = vmatpush1.bf16.msra.mxu0 %v2655
      %2685 = vmatprep.subr.bf16.mxu0 0
      %2686 = vmatpush1.bf16.msra.mxu0 %v2656
      %2687 = vmatprep.subr.bf16.mxu0 0
      %2688 = vmatpush1.bf16.msra.mxu0 0
      %2689 = vmatprep.subr.bf16.mxu0 0
      %2690 = vmatpush1.bf16.msra.mxu0 0
      %2691 = vmatprep.subr.bf16.mxu0 0
      %2692 = vmatpush1.bf16.msra.mxu0 0
      %2693 = vmatprep.subr.bf16.mxu0 0
      %2694 = vmatpush1.bf16.msra.mxu0 0
      %2695 = vmatprep.subr.bf16.mxu0 0
      %2696 = vmatpush1.bf16.msra.mxu0 0
      %2697 = vmatprep.subr.bf16.mxu0 0
      %2698 = vmatpush1.bf16.msra.mxu0 0
      %2699 = vmatprep.subr.bf16.mxu0 0
      %2700 = vmatpush1.bf16.msra.mxu0 0
      %2701 = vmatprep.subr.bf16.mxu0 0
      %2702 = vmatpush1.bf16.msra.mxu0 0
      %2703 = vmatprep.subr.bf16.mxu0 0
      %2704 = vmatpush1.bf16.msra.mxu0 0
      %2705 = vmatprep.subr.bf16.mxu0 0
      %2706 = vmatpush1.bf16.msra.mxu0 0
      %2707 = vmatprep.subr.bf16.mxu0 0
      %2708 = vmatpush1.bf16.msra.mxu0 0
      %2709 = vmatprep.subr.bf16.mxu0 0
      %2710 = vmatpush1.bf16.msra.mxu0 0
      %2711 = vmatprep.subr.bf16.mxu0 0
      %2712 = vmatpush1.bf16.msra.mxu0 0
      %2713 = vmatprep.subr.bf16.mxu0 0
      %2714 = vmatpush1.bf16.msra.mxu0 0
      %2715 = vmatprep.mubr.bf16.mxu0 0
      %2716 = vmatmul.mubr.bf16.gmra.mrb[0].mxu0 %v2660
      %v2717 = vpop.f32.mrb[0].mxu0
      %v2718 = vadd.f32 0.0, %v2717
      %v2719 = vpop.f32.mrb[0].mxu0
      %v2720 = vpop.f32.mrb[0].mxu0
      %v2721 = vadd.f32 0.0, %v2720
      %v2722 = vpop.f32.mrb[0].mxu0
      %2723 = vmatprep.mubr.bf16.mxu0 0
      %2724 = vmatmul.mubr.bf16.gmra.mrb[0].mxu0 %v2663
      %v2725 = vpop.f32.mrb[0].mxu0
      %v2726 = vadd.f32 0.0, %v2725
      %v2727 = vpop.f32.mrb[0].mxu0
      %v2728 = vpop.f32.mrb[0].mxu0
      %v2729 = vadd.f32 0.0, %v2728
      %v2730 = vpop.f32.mrb[0].mxu0
      %2731 = vmatprep.mubr.bf16.mxu0 0
      %2732 = vmatmul.mubr.bf16.gmra.mrb[0].mxu0 %v2666
      %v2733 = vpop.f32.mrb[0].mxu0
      %v2734 = vadd.f32 0.0, %v2733
      %v2735 = vpop.f32.mrb[0].mxu0
      %v2736 = vpop.f32.mrb[0].mxu0
      %v2737 = vadd.f32 0.0, %v2736
      %v2738 = vpop.f32.mrb[0].mxu0
      %2739 = vmatprep.mubr.bf16.mxu0 0
      %2740 = vmatmul.mubr.bf16.gmra.mrb[0].mxu0 %v2669
      %v2741 = vpop.f32.mrb[0].mxu0
      %v2742 = vadd.f32 0.0, %v2741
      %v2743 = vpop.f32.mrb[0].mxu0
      %v2744 = vpop.f32.mrb[0].mxu0
      %v2745 = vadd.f32 0.0, %v2744
      %v2746 = vpop.f32.mrb[0].mxu0
      %2747 = vmatprep.mubr.bf16.mxu0 0
      %2748 = vmatmul.mubr.bf16.gmra.mrb[0].mxu0 %v2672
      %v2749 = vpop.f32.mrb[0].mxu0
      %v2750 = vadd.f32 0.0, %v2749
      %v2751 = vpop.f32.mrb[0].mxu0
      %v2752 = vpop.f32.mrb[0].mxu0
      %v2753 = vadd.f32 0.0, %v2752
      %v2754 = vpop.f32.mrb[0].mxu0
      %2755 = vmatprep.mubr.bf16.mxu0 0
      %2756 = vmatmul.mubr.bf16.gmra.mrb[0].mxu0 %v2675
      %v2757 = vpop.f32.mrb[0].mxu0
      %v2758 = vadd.f32 0.0, %v2757
      %v2759 = vpop.f32.mrb[0].mxu0
      %v2760 = vpop.f32.mrb[0].mxu0
      %v2761 = vadd.f32 0.0, %v2760
      %v2762 = vpop.f32.mrb[0].mxu0
      %2763 = vmatprep.mubr.bf16.mxu0 0
      %2764 = vmatmul.mubr.bf16.gmra.mrb[0].mxu0 %v2678
      %v2765 = vpop.f32.mrb[0].mxu0
      %v2766 = vadd.f32 0.0, %v2765
      %v2767 = vpop.f32.mrb[0].mxu0
      %v2768 = vpop.f32.mrb[0].mxu0
      %v2769 = vadd.f32 0.0, %v2768
      %v2770 = vpop.f32.mrb[0].mxu0
      %2771 = vmatprep.mubr.bf16.mxu0 0
      %2772 = vmatmul.mubr.bf16.gmra.mrb[0].mxu0 %v2681
      %v2773 = vpop.f32.mrb[0].mxu0
      %v2774 = vadd.f32 0.0, %v2773
      %v2775 = vpop.f32.mrb[0].mxu0
      %v2776 = vpop.f32.mrb[0].mxu0
      %v2777 = vadd.f32 0.0, %v2776
      %v2778 = vpop.f32.mrb[0].mxu0
      %2779 = vdwg.mxu0
      %v2780 = vadd.f32 %v2559, %v2718
      %v2781 = vadd.f32 %v2562, %v2721
      %v2782 = vadd.f32 %v2567, %v2726
      %v2783 = vadd.f32 %v2570, %v2729
      %v2784 = vadd.f32 %v2575, %v2734
      %v2785 = vadd.f32 %v2578, %v2737
      %v2786 = vadd.f32 %v2583, %v2742
      %v2787 = vadd.f32 %v2586, %v2745
      %v2788 = vadd.f32 %v2591, %v2750
      %v2789 = vadd.f32 %v2594, %v2753
      %v2790 = vadd.f32 %v2599, %v2758
      %v2791 = vadd.f32 %v2602, %v2761
      %v2792 = vadd.f32 %v2607, %v2766
      %v2793 = vadd.f32 %v2610, %v2769
      %v2794 = vadd.f32 %v2615, %v2774
      %v2795 = vadd.f32 %v2618, %v2777
      %v2796 = vld [vmem:[%s6] sm:$0x1]
      %v2798 = vlaneseq
      %v2799 = vshrl.u32 %v2798, 7
      %v2800 = vsub.s32 0, %v2799
      %v2801 = vrot.slane %v2796, %v2800
      %v2803 = vadd.f32 %v2780, %v2801
      %v2804 = vadd.f32 %v2781, %v2801
      %v2805 = vadd.f32 %v2782, %v2801
      %v2806 = vadd.f32 %v2783, %v2801
      %v2807 = vadd.f32 %v2784, %v2801
      %v2808 = vadd.f32 %v2785, %v2801
      %v2809 = vadd.f32 %v2786, %v2801
      %v2810 = vadd.f32 %v2787, %v2801
      %v2811 = vadd.f32 %v2788, %v2801
      %v2812 = vadd.f32 %v2789, %v2801
      %v2813 = vadd.f32 %v2790, %v2801
      %v2814 = vadd.f32 %v2791, %v2801
      %v2815 = vadd.f32 %v2792, %v2801
      %v2816 = vadd.f32 %v2793, %v2801
      %v2817 = vadd.f32 %v2794, %v2801
      %v2818 = vadd.f32 %v2795, %v2801
      %vm2819 = vcmask 130048
      %2820 = vst.msk [vmem:[%s278] sm:$0xff] %vm2819, %v2803
      %2821 = vst.msk [vmem:[%s278 + $0x8] sm:$0xff] %vm2819, %v2804
      %2822 = vst.msk [vmem:[%s278 + $0x10] sm:$0xff] %vm2819, %v2805
      %2823 = vst.msk [vmem:[%s278 + $0x18] sm:$0xff] %vm2819, %v2806
      %2824 = vst.msk [vmem:[%s278 + $0x20] sm:$0xff] %vm2819, %v2807
      %2825 = vst.msk [vmem:[%s278 + $0x28] sm:$0xff] %vm2819, %v2808
      %2826 = vst.msk [vmem:[%s278 + $0x30] sm:$0xff] %vm2819, %v2809
      %2827 = vst.msk [vmem:[%s278 + $0x38] sm:$0xff] %vm2819, %v2810
      %2828 = vst.msk [vmem:[%s278 + $0x40] sm:$0xff] %vm2819, %v2811
      %2829 = vst.msk [vmem:[%s278 + $0x48] sm:$0xff] %vm2819, %v2812
      %2830 = vst.msk [vmem:[%s278 + $0x50] sm:$0xff] %vm2819, %v2813
      %2831 = vst.msk [vmem:[%s278 + $0x58] sm:$0xff] %vm2819, %v2814
      %2832 = vst.msk [vmem:[%s278 + $0x60] sm:$0xff] %vm2819, %v2815
      %2833 = vst.msk [vmem:[%s278 + $0x68] sm:$0xff] %vm2819, %v2816
      %2834 = vst.msk [vmem:[%s278 + $0x70] sm:$0xff] %vm2819, %v2817
      %2835 = vst.msk [vmem:[%s278 + $0x78] sm:$0xff] %vm2819, %v2818
      %p2836 = scmp.lt.s32.totalorder %s18, 1
      %s2837 = scalar_select %p2836, %s18, 1
      %s2838 = smul.addr %s2837, 16
      %s2839 = smul.addr %s2838, 8
      %s2840 = scalar_lea.vmem %s7, %s2839
      // Predicated region
      $region49: #{tpu_custom_call.1} parent=47 // pred_check
        %p2841 = pneg %p188
      $region50: #{tpu_custom_call.1} parent=47 // pred_check_branch
        %2843 = sbr.rel (%p2841) target = $region52
      $region51: #{tpu_custom_call.1} parent=47 // pred_region
        _
      $region52: #{tpu_custom_call.1} parent=47 // pred_fallthru
        _
    $region48: #{tpu_custom_call.1} parent=5 // pred_fallthru
      _
    %p2844 = scmp.le.s32.totalorder 2, %s13
    // Predicated region
    $region53: #{tpu_custom_call.1} parent=5 // pred_check
      %p2845 = pneg %p2844
    $region54: #{tpu_custom_call.1} parent=5 // pred_check_branch
      %2847 = sbr.rel (%p2845) target = $region56
    $region55: #{tpu_custom_call.1} parent=5 // pred_region
      %s2848 = ssub.s32 %s13, 2
      // Predicated region
      $region57: #{tpu_custom_call.1} parent=55 // pred_check
        %p2849 = pneg %p194
      $region58: #{tpu_custom_call.1} parent=55 // pred_check_branch
        %2851 = sbr.rel (%p2849) target = $region60
      $region59: #{tpu_custom_call.1} parent=55 // pred_region
        %p2852 = scmp.lt.s32.totalorder %s19, 1
        %s2853 = scalar_select %p2852, %s19, 1
        %s2854 = smul.addr %s2853, 16
        %s2855 = smul.addr %s2854, 8
        %s2856 = scalar_lea.vmem %s7, %s2855
      $region60: #{tpu_custom_call.1} parent=55 // pred_fallthru
        _
    $region56: #{tpu_custom_call.1} parent=5 // pred_fallthru
      _
  $region6: #{tpu_custom_call.1} parent=0 // loop_footer
    %s17 = sadd.s32 1, %s13
  $region7: #{tpu_custom_call.1} parent=0 // loop_footer_branch
    %12 = sbr.rel target = $region3
  $region8: #{tpu_custom_call.1} parent=0 // loop_exit
    _

</llo_original>
